<compile_context>
chip_gen: v7x
topology: tpu7x:2x2x1
jax: 0.10.0
libtpu: 0.0.40
codegen_flags: <defaults>
</compile_context>

<pallas_src>
import numpy as np
import jax
import jax.numpy as jnp
from jax.experimental import pallas as pl
from jax.experimental.pallas import tpu as pltpu


LANE = 128          # lane-pad hidden (intermediate) feature dims to 128
SUBLANE = 8
DEFAULT_TB = 2048   # desired batch rows per grid step


def _round_up(x: int, m: int) -> int:
    return ((x + m - 1) // m) * m


def _cdiv(a: int, b: int) -> int:
    return (a + b - 1) // b


def _vmem_budget_bytes() -> int:
    """Generation-aware VMEM budget (~60% of per-core capacity).

    Falls back to a conservative 64 MiB capacity (v7x per-TC, the smallest)
    if the hardware query is unavailable.
    """
    try:
        cap = int(pltpu.get_tpu_info().vmem_capacity_bytes)
    except Exception:
        cap = 64 * 1024 * 1024
    return max(8 * 1024 * 1024, int(cap * 0.6))


# ----------------------------- Pallas kernel ------------------------------- #

def _make_prober_kernel(emb, layer_dims_p, out_dim, num_layers):
    """Kernel over one (tb, emb) batch block.

    Refs: x (tb, emb) f32/bf16, w_slab (L, max_in_p, max_out_p) bf16,
          b_slab (L, 1, max_out_p) f32, out (tb, out_dim) f32.
    emb / out_dim are the TRUE (unpadded) input/output widths; layer_dims_p
    are the 128-padded per-layer (in, out) dims used for the slab slices.
    """

    def kernel(x_ref, w_ref, b_ref, o_ref):
        h = x_ref[...].astype(jnp.bfloat16)              # (tb, emb) bf16
        for layer in range(num_layers):
            din = emb if layer == 0 else layer_dims_p[layer][0]
            dout = layer_dims_p[layer][1]
            w = w_ref[layer, :din, :dout]                # bf16, static slice
            # bf16 MXU operands, f32 accumulation; bias/ReLU stay in f32.
            h = jnp.dot(h, w, preferred_element_type=jnp.float32)
            h = h + b_ref[layer, :, :dout]               # (1, dout) broadcast
            if layer < num_layers - 1:
                h = jnp.maximum(h, 0.0).astype(jnp.bfloat16)   # ReLU
        # Padded output columns are exactly zero -> drop them before storing
        # so the HBM write stream is only out_dim lanes wide.
        o_ref[...] = h[:, :out_dim]

    return kernel


# ------------------------------ Python glue -------------------------------- #

def init_prober_params(key, embedding: int, arch: str, output_shape):
    """PyTorch nn.Linear default init: U(-1/sqrt(fan_in), 1/sqrt(fan_in))."""
    output_dim = int(np.prod(output_shape))
    arch_list = list(map(int, arch.split("-"))) if arch != "" else []
    dims = [embedding] + arch_list + [output_dim]

    params = []
    for i in range(len(dims) - 1):
        fan_in, fan_out = dims[i], dims[i + 1]
        key, kw, kb = jax.random.split(key, 3)
        bound = 1.0 / np.sqrt(fan_in)
        # weight stored as (in, out) == PyTorch (out, in) transposed
        w = jax.random.uniform(kw, (fan_in, fan_out), jnp.float32, -bound, bound)
        b = jax.random.uniform(kb, (fan_out,), jnp.float32, -bound, bound)
        params.append((w, b))
    return params, dims


def pack_prober_params(params, dims):
    """Zero-pad every feature dim to a multiple of 128 and concatenate all
    layer weights / biases into two slabs (bf16 weights, f32 biases).
    Padded rows/columns are zero, so results are unchanged."""
    dims_p = [_round_up(d, LANE) for d in dims]
    num_layers = len(params)
    max_in = max(dims_p[:-1])
    max_out = max(dims_p[1:])

    w_slab = np.zeros((num_layers, max_in, max_out), np.float32)
    b_slab = np.zeros((num_layers, 1, max_out), np.float32)
    for i, (w, b) in enumerate(params):
        w_np = np.asarray(w)
        b_np = np.asarray(b)
        w_slab[i, : w_np.shape[0], : w_np.shape[1]] = w_np
        b_slab[i, 0, : b_np.shape[0]] = b_np

    layer_dims_p = [(dims_p[i], dims_p[i + 1]) for i in range(num_layers)]
    return (jnp.asarray(w_slab, jnp.bfloat16),
            jnp.asarray(b_slab, jnp.float32),
            dims_p, layer_dims_p)


def _choose_batch_tile(batch, emb, out_dim, max_act_p, in_itemsize,
                       w_bytes, b_bytes, budget):
    """Pick the batch tile: big (amortize per-step overhead), fits VMEM,
    minimizes batch-padding waste, and keeps >=2 grid steps for v7x."""
    # Resident slabs are double-buffered by Pallas even with constant
    # index_maps -> count them twice.
    fixed = 2 * (w_bytes + b_bytes)
    # Per-row bytes: double-buffered input + output blocks plus intermediate
    # activations (f32 + bf16 copies), with a small fudge term.
    per_row = 2 * emb * in_itemsize + 2 * out_dim * 4 + max_act_p * 6 + 64
    avail = budget - fixed
    tb_cap = SUBLANE
    if avail > per_row * SUBLANE:
        tb_cap = max(SUBLANE, (avail // per_row) // SUBLANE * SUBLANE)

    n_steps = max(1, _cdiv(batch, DEFAULT_TB))
    if batch >= 2 * SUBLANE:
        n_steps = max(n_steps, 2)      # >=2 steps -> both v7x TCs get work
    tb = _round_up(_cdiv(batch, n_steps), SUBLANE)   # <8 pad rows per step
    tb = max(SUBLANE, min(tb, tb_cap))
    return tb


def prober_forward(e, w_slab, b_slab, dims, dims_p, layer_dims_p):
    """Full MLP in one pallas_call with a pipelined batch grid.

    e: (batch, embedding) float32 or bfloat16 -> (batch, output_dim) float32.
    """
    batch, emb = e.shape
    assert emb == dims[0], (emb, dims[0])
    out_dim = dims[-1]
    num_layers = len(layer_dims_p)

    budget = _vmem_budget_bytes()
    max_act_p = max(dims_p[1:])
    tb = _choose_batch_tile(
        batch, emb, out_dim, max_act_p, e.dtype.itemsize,
        int(w_slab.size) * w_slab.dtype.itemsize,
        int(b_slab.size) * b_slab.dtype.itemsize,
        budget)
    batch_p = _round_up(batch, tb)

    # Only pad batch rows (zero rows are inert and sliced off below); the
    # embedding dim stays unpadded so the input DMA carries no padding bytes.
    e_p = e if batch_p == batch else jnp.pad(e, ((0, batch_p - batch), (0, 0)))

    kernel = _make_prober_kernel(emb, layer_dims_p, out_dim, num_layers)

    out_padded = pl.pallas_call(
        kernel,
        out_shape=jax.ShapeDtypeStruct((batch_p, out_dim), jnp.float32),
        grid=(batch_p // tb,),
        in_specs=[
            pl.BlockSpec((tb, emb), lambda i: (i, 0)),        # activation rows
            pl.BlockSpec(w_slab.shape, lambda i: (0, 0, 0)),  # resident weights
            pl.BlockSpec(b_slab.shape, lambda i: (0, 0, 0)),  # resident biases
        ],
        out_specs=pl.BlockSpec((tb, out_dim), lambda i: (i, 0)),
        compiler_params=pltpu.CompilerParams(
            dimension_semantics=("parallel",),      # 2 TCs on v7x
            vmem_limit_bytes=int(budget)),
    )(e_p, w_slab, b_slab)

    return out_padded[:batch]


# -------------------------------- Reference -------------------------------- #

def prober_reference(e, params):
    """Same math as the kernel: bf16 MXU operands, f32 accumulate/bias/ReLU."""
    h = e
    for i, (w, b) in enumerate(params):
        h = jnp.dot(h.astype(jnp.bfloat16), w.astype(jnp.bfloat16),
                    preferred_element_type=jnp.float32) + b[None, :]
        if i < len(params) - 1:
            h = jnp.maximum(h, 0.0)
    return h


# ---------------------------------- Main ----------------------------------- #

if __name__ == "__main__":
    embedding = 32
    arch = "64-32"          # Linear(32,64) ReLU Linear(64,32) ReLU Linear(32,4)
    output_shape = [2, 2]   # output_dim = 4
    batch = 1024            # exercises the batch grid (2 steps of 512 rows)

    key = jax.random.PRNGKey(0)
    key, k_in = jax.random.split(key)

    params, dims = init_prober_params(key, embedding, arch, output_shape)
    w_slab, b_slab, dims_p, layer_dims_p = pack_prober_params(params, dims)

    e = jax.random.normal(k_in, (batch, embedding), dtype=jnp.float32)

    out = prober_forward(e, w_slab, b_slab, dims, dims_p, layer_dims_p)
    out = jax.block_until_ready(out)

    ref = prober_reference(e, params)
    assert out.shape == (batch, dims[-1]), out.shape
    np.testing.assert_allclose(np.asarray(out), np.asarray(ref),
                               rtol=1e-4, atol=1e-4)

    print("KERNEL_OK")
</pallas_src>

<mosaic_0001>
module attributes {stable_mosaic.version = 11 : i64} {
  func.func @kernel(%arg0: i32, %arg1: memref<512x32xf32, #tpu.memory_space<vmem>>, %arg2: memref<3x128x128xbf16, #tpu.memory_space<vmem>>, %arg3: memref<3x1x128xf32, #tpu.memory_space<vmem>>, %arg4: memref<512x4xf32, #tpu.memory_space<vmem>>) attributes {dimension_semantics = [#tpu.dimension_semantics<parallel>], iteration_bounds = array<i64: 2>, scalar_prefetch = 0 : i64, scratch_operands = 0 : i64, tpu.core_type = #tpu.core_type<tc>, window_params = [{transform_indices = @transform_0, window_bounds = array<i64: 512, 32>}, {pipeline_mode = #tpu.pipeline_mode<synchronous>, transform_indices = @transform_1, window_bounds = array<i64: 3, 128, 128>}, {pipeline_mode = #tpu.pipeline_mode<synchronous>, transform_indices = @transform_2, window_bounds = array<i64: 3, 1, 128>}, {transform_indices = @transform_3, window_bounds = array<i64: 512, 4>}]} {
    %c0 = arith.constant 0 : index
    %c0_0 = arith.constant 0 : index
    %0 = vector.load %arg1[%c0, %c0_0] : memref<512x32xf32, #tpu.memory_space<vmem>>, vector<512x32xf32>
    %1 = arith.truncf %0 : vector<512x32xf32> to vector<512x32xbf16>
    %c0_1 = arith.constant 0 : index
    %c0_2 = arith.constant 0 : index
    %c0_3 = arith.constant 0 : index
    %2 = vector.load %arg2[%c0_1, %c0_2, %c0_3] : memref<3x128x128xbf16, #tpu.memory_space<vmem>>, vector<1x32x128xbf16>
    %3 = vector.shape_cast %2 : vector<1x32x128xbf16> to vector<32x128xbf16>
    %cst = arith.constant dense<0.000000e+00> : vector<512x128xf32>
    %4 = tpu.matmul %1, %3, %cst {dimension_numbers = #tpu.dot_dimension_numbers<[1], [0], [0], [1], [0, 0, 1, 1], [], []>} : vector<512x32xbf16>, vector<32x128xbf16>, vector<512x128xf32> -> vector<512x128xf32>
    %c0_4 = arith.constant 0 : index
    %c0_5 = arith.constant 0 : index
    %c0_6 = arith.constant 0 : index
    %5 = vector.load %arg3[%c0_4, %c0_5, %c0_6] : memref<3x1x128xf32, #tpu.memory_space<vmem>>, vector<1x1x128xf32>
    %6 = vector.shape_cast %5 : vector<1x1x128xf32> to vector<1x128xf32>
    %7 = vector.broadcast %6 : vector<1x128xf32> to vector<512x128xf32>
    %8 = arith.addf %4, %7 : vector<512x128xf32>
    %cst_7 = arith.constant 0.000000e+00 : f32
    %9 = vector.broadcast %cst_7 : f32 to vector<512x128xf32>
    %10 = arith.maximumf %8, %9 : vector<512x128xf32>
    %11 = arith.truncf %10 : vector<512x128xf32> to vector<512x128xbf16>
    %c1 = arith.constant 1 : index
    %c0_8 = arith.constant 0 : index
    %c0_9 = arith.constant 0 : index
    %12 = vector.load %arg2[%c1, %c0_8, %c0_9] : memref<3x128x128xbf16, #tpu.memory_space<vmem>>, vector<1x128x128xbf16>
    %13 = vector.shape_cast %12 : vector<1x128x128xbf16> to vector<128x128xbf16>
    %cst_10 = arith.constant dense<0.000000e+00> : vector<512x128xf32>
    %14 = tpu.matmul %11, %13, %cst_10 {dimension_numbers = #tpu.dot_dimension_numbers<[1], [0], [0], [1], [0, 0, 1, 1], [], []>} : vector<512x128xbf16>, vector<128x128xbf16>, vector<512x128xf32> -> vector<512x128xf32>
    %c1_11 = arith.constant 1 : index
    %c0_12 = arith.constant 0 : index
    %c0_13 = arith.constant 0 : index
    %15 = vector.load %arg3[%c1_11, %c0_12, %c0_13] : memref<3x1x128xf32, #tpu.memory_space<vmem>>, vector<1x1x128xf32>
    %16 = vector.shape_cast %15 : vector<1x1x128xf32> to vector<1x128xf32>
    %17 = vector.broadcast %16 : vector<1x128xf32> to vector<512x128xf32>
    %18 = arith.addf %14, %17 : vector<512x128xf32>
    %cst_14 = arith.constant 0.000000e+00 : f32
    %19 = vector.broadcast %cst_14 : f32 to vector<512x128xf32>
    %20 = arith.maximumf %18, %19 : vector<512x128xf32>
    %21 = arith.truncf %20 : vector<512x128xf32> to vector<512x128xbf16>
    %c2 = arith.constant 2 : index
    %c0_15 = arith.constant 0 : index
    %c0_16 = arith.constant 0 : index
    %22 = vector.load %arg2[%c2, %c0_15, %c0_16] : memref<3x128x128xbf16, #tpu.memory_space<vmem>>, vector<1x128x128xbf16>
    %23 = vector.shape_cast %22 : vector<1x128x128xbf16> to vector<128x128xbf16>
    %cst_17 = arith.constant dense<0.000000e+00> : vector<512x128xf32>
    %24 = tpu.matmul %21, %23, %cst_17 {dimension_numbers = #tpu.dot_dimension_numbers<[1], [0], [0], [1], [0, 0, 1, 1], [], []>} : vector<512x128xbf16>, vector<128x128xbf16>, vector<512x128xf32> -> vector<512x128xf32>
    %c2_18 = arith.constant 2 : index
    %c0_19 = arith.constant 0 : index
    %c0_20 = arith.constant 0 : index
    %25 = vector.load %arg3[%c2_18, %c0_19, %c0_20] : memref<3x1x128xf32, #tpu.memory_space<vmem>>, vector<1x1x128xf32>
    %26 = vector.shape_cast %25 : vector<1x1x128xf32> to vector<1x128xf32>
    %27 = vector.broadcast %26 : vector<1x128xf32> to vector<512x128xf32>
    %28 = arith.addf %24, %27 : vector<512x128xf32>
    %29 = vector.extract_strided_slice %28 {offsets = [0, 0], sizes = [512, 4], strides = [1, 1]} : vector<512x128xf32> to vector<512x4xf32>
    %c0_21 = arith.constant 0 : index
    %c0_22 = arith.constant 0 : index
    %30 = vector.load %arg4[%c0_21, %c0_22] : memref<512x4xf32, #tpu.memory_space<vmem>>, vector<512x4xf32>
    tpu.vector_store %arg4[%c0_21, %c0_22], %29 {strides = array<i32>} : memref<512x4xf32, #tpu.memory_space<vmem>>, vector<512x4xf32>,
    return
  }
  func.func @transform_0(%arg0: i32) -> (i32, i32) {
    %c0_i32 = arith.constant 0 : i32
    %c0_i32_0 = arith.constant 0 : i32
    return %arg0, %c0_i32 : i32, i32
  }
  func.func @transform_1(%arg0: i32) -> (i32, i32, i32) {
    %c0_i32 = arith.constant 0 : i32
    %c0_i32_0 = arith.constant 0 : i32
    %c0_i32_1 = arith.constant 0 : i32
    %c0_i32_2 = arith.constant 0 : i32
    return %c0_i32, %c0_i32_0, %c0_i32_1 : i32, i32, i32
  }
  func.func @transform_2(%arg0: i32) -> (i32, i32, i32) {
    %c0_i32 = arith.constant 0 : i32
    %c0_i32_0 = arith.constant 0 : i32
    %c0_i32_1 = arith.constant 0 : i32
    %c0_i32_2 = arith.constant 0 : i32
    return %c0_i32, %c0_i32_0, %c0_i32_1 : i32, i32, i32
  }
  func.func @transform_3(%arg0: i32) -> (i32, i32) {
    %c0_i32 = arith.constant 0 : i32
    %c0_i32_0 = arith.constant 0 : i32
    return %arg0, %c0_i32 : i32, i32
  }
}

</mosaic_0001>

<llo_original>
// kernel: tpu_custom_call.1
$region0: #{tpu_custom_call.1}
  #allocation0 [shape = 'u32[]', space=smem, size = 0x4, offset = 0x4, fixed_abs, tag = 'smem constant byte address 0x4 - core index']
  #allocation1 [shape = 'u32[144,128]{1,0:T(1,128)}', space=vmem, size = 0x12000, scoped, tag = 'internal scratch']
  %s0 = inlined_call_operand.vmem [shape: f32[1024,32], index: 0, kind: input, shape index: {}]
  %s1 = inlined_call_operand.vmem [shape: bf16[3,128,128], index: 1, kind: input, shape index: {}]
  %s2 = inlined_call_operand.vmem [shape: f32[3,1,128], index: 2, kind: input, shape index: {}]
  %s3 = inlined_call_operand.vmem [shape: f32[1024,4], index: 3, kind: output, shape index: {}]
  %s4 = sld [smem:[#allocation0]]
  $region45: #{tpu_custom_call.1} parent=0
    _
  %s6 = ssub.s32 1, %s4
  %s7 = scalar_select 0, %s6, %s4
  loop: start=0, step=1, limit=4
  $region2: #{tpu_custom_call.1} parent=0 // loop_pre_header
    _
  $region3: #{tpu_custom_call.1} parent=0 // loop_header
    %s9 = sphi 0, %s13
    %p10 = scmp.ge.s32.totalorder %s9, 4
    %s19 = sphi 0, %s21
    %s22 = sphi 0, %s19
    %s23 = sphi 0, %s22
    %s39 = sphi 0, %s23
    %s43 = sphi 0, %s43
    %s45 = sphi 0, %s43
    %s46 = sphi 0, %s45
    %s60 = sphi 0, %s46
    %s64 = sphi 0, %s64
    %s66 = sphi 0, %s64
    %s67 = sphi 0, %s66
    %s81 = sphi 0, %s67
    %s87 = sphi 0, %s89
    %s90 = sphi 0, %s87
    %s91 = sphi 0, %s90
    %s107 = sphi 0, %s91
  $region4: #{tpu_custom_call.1} parent=0 // loop_header_branch
    %12 = sbr.rel (%p10) target = $region8
  $region5: #{tpu_custom_call.1} parent=0 // loop_body
    %s14 = ssub.s32 %s9, 1
    %s15 = ssub.s32 %s9, 2
    %s16 = sadd.s32 %s9, 1
    %s17 = ssub.s32 %s9, %s16
    %p18 = scmp.eq.s32.totalorder %s17, 0
    %s20 = sadd.s32 %s19, 1
    %s21 = scalar_select %p18, %s19, %s20
    %p24 = pneg %p18
    %p25 = scmp.eq.s32.totalorder %s9, 1
    %p26 = por %p24, %p25
    %p27 = scmp.ne.s32.totalorder %s19, %s22
    %p28 = scmp.eq.s32.totalorder %s9, 0
    %p29 = por %p27, %p28
    %p30 = scmp.ne.s32.totalorder %s19, %s22
    %p31 = scmp.eq.s32.totalorder %s14, 1
    %p32 = por %p30, %p31
    %p33 = scmp.ne.s32.totalorder %s22, %s23
    %p34 = scmp.eq.s32.totalorder %s14, 0
    %p35 = por %p33, %p34
    %p36 = scmp.ne.s32.totalorder %s22, %s23
    %p37 = scmp.eq.s32.totalorder %s15, 1
    %p38 = por %p36, %p37
    %p40 = scmp.ne.s32.totalorder %s23, %s39
    %p41 = scmp.eq.s32.totalorder %s15, 0
    %p42 = por %p40, %p41
    %s44 = sadd.s32 %s43, 1
    %p47 = scmp.eq.s32.totalorder %s9, 1
    %p48 = scmp.ne.s32.totalorder %s43, %s45
    %p49 = scmp.eq.s32.totalorder %s9, 0
    %p50 = por %p48, %p49
    %p51 = scmp.ne.s32.totalorder %s43, %s45
    %p52 = scmp.eq.s32.totalorder %s14, 1
    %p53 = por %p51, %p52
    %p54 = scmp.ne.s32.totalorder %s45, %s46
    %p55 = scmp.eq.s32.totalorder %s14, 0
    %p56 = por %p54, %p55
    %p57 = scmp.ne.s32.totalorder %s45, %s46
    %p58 = scmp.eq.s32.totalorder %s15, 1
    %p59 = por %p57, %p58
    %p61 = scmp.ne.s32.totalorder %s46, %s60
    %p62 = scmp.eq.s32.totalorder %s15, 0
    %p63 = por %p61, %p62
    %s65 = sadd.s32 %s64, 1
    %p68 = scmp.eq.s32.totalorder %s9, 1
    %p69 = scmp.ne.s32.totalorder %s64, %s66
    %p70 = scmp.eq.s32.totalorder %s9, 0
    %p71 = por %p69, %p70
    %p72 = scmp.ne.s32.totalorder %s64, %s66
    %p73 = scmp.eq.s32.totalorder %s14, 1
    %p74 = por %p72, %p73
    %p75 = scmp.ne.s32.totalorder %s66, %s67
    %p76 = scmp.eq.s32.totalorder %s14, 0
    %p77 = por %p75, %p76
    %p78 = scmp.ne.s32.totalorder %s66, %s67
    %p79 = scmp.eq.s32.totalorder %s15, 1
    %p80 = por %p78, %p79
    %p82 = scmp.ne.s32.totalorder %s67, %s81
    %p83 = scmp.eq.s32.totalorder %s15, 0
    %p84 = por %p82, %p83
    %s85 = ssub.s32 %s9, %s16
    %p86 = scmp.eq.s32.totalorder %s85, 0
    %s88 = sadd.s32 %s87, 1
    %s89 = scalar_select %p86, %s87, %s88
    %p92 = pneg %p86
    %p93 = scmp.eq.s32.totalorder %s9, 1
    %p94 = por %p92, %p93
    %p95 = scmp.ne.s32.totalorder %s87, %s90
    %p96 = scmp.eq.s32.totalorder %s9, 0
    %p97 = por %p95, %p96
    %p98 = scmp.ne.s32.totalorder %s87, %s90
    %p99 = scmp.eq.s32.totalorder %s14, 1
    %p100 = por %p98, %p99
    %p101 = scmp.ne.s32.totalorder %s90, %s91
    %p102 = scmp.eq.s32.totalorder %s14, 0
    %p103 = por %p101, %p102
    %p104 = scmp.ne.s32.totalorder %s90, %s91
    %p105 = scmp.eq.s32.totalorder %s15, 1
    %p106 = por %p104, %p105
    %p108 = scmp.ne.s32.totalorder %s91, %s107
    %p109 = scmp.eq.s32.totalorder %s15, 0
    %p110 = por %p108, %p109
    %p111 = scmp.le.s32.totalorder 1, %s9
    %p112 = scmp.lt.s32.totalorder %s9, 3
    %p113 = pnand %p111, %p112
    %p114 = pneg %p113
    // Predicated region
    $region9: #{tpu_custom_call.1} parent=5 // pred_check
      _
    $region10: #{tpu_custom_call.1} parent=5 // pred_check_branch
      %116 = sbr.rel (%p113) target = $region12
    $region11: #{tpu_custom_call.1} parent=5 // pred_region
      %s117 = ssub.s32 %s9, 1
      // Predicated region
      $region13: #{tpu_custom_call.1} parent=11 // pred_check
        %p118 = pneg %p56
      $region14: #{tpu_custom_call.1} parent=11 // pred_check_branch
        %120 = sbr.rel (%p118) target = $region16
      $region15: #{tpu_custom_call.1} parent=11 // pred_region
        _
      $region16: #{tpu_custom_call.1} parent=11 // pred_fallthru
        _
      // Predicated region
      $region17: #{tpu_custom_call.1} parent=11 // pred_check
        %p121 = pneg %p77
      $region18: #{tpu_custom_call.1} parent=11 // pred_check_branch
        %123 = sbr.rel (%p121) target = $region20
      $region19: #{tpu_custom_call.1} parent=11 // pred_region
        _
      $region20: #{tpu_custom_call.1} parent=11 // pred_fallthru
        _
    $region12: #{tpu_custom_call.1} parent=5 // pred_fallthru
      _
    %p124 = scmp.lt.s32.totalorder %s9, 2
    // Predicated region
    $region21: #{tpu_custom_call.1} parent=5 // pred_check
      %p125 = pneg %p124
    $region22: #{tpu_custom_call.1} parent=5 // pred_check_branch
      %127 = sbr.rel (%p125) target = $region24
    $region23: #{tpu_custom_call.1} parent=5 // pred_region
      // Predicated region
      $region25: #{tpu_custom_call.1} parent=23 // pred_check
        %p128 = pneg %p29
      $region26: #{tpu_custom_call.1} parent=23 // pred_check_branch
        %130 = sbr.rel (%p128) target = $region28
      $region27: #{tpu_custom_call.1} parent=23 // pred_region
        %s131 = smul.u32 64, %s9
        %p132 = scmp.lt.s32.totalorder %s131, 127
        %s133 = scalar_select %p132, %s131, 127
        %s134 = smul.addr %s133, 8
        %s135 = scalar_lea.vmem %s0, %s134
        %s136 = smul.u32 64, %s9
      $region28: #{tpu_custom_call.1} parent=23 // pred_fallthru
        _
    $region24: #{tpu_custom_call.1} parent=5 // pred_fallthru
      _
    %p137 = scmp.le.s32.totalorder 1, %s9
    %p138 = scmp.lt.s32.totalorder %s9, 3
    %p139 = pnand %p137, %p138
    %p140 = pneg %p139
    // Predicated region
    $region29: #{tpu_custom_call.1} parent=5 // pred_check
      _
    $region30: #{tpu_custom_call.1} parent=5 // pred_check_branch
      %142 = sbr.rel (%p139) target = $region32
    $region31: #{tpu_custom_call.1} parent=5 // pred_region
      %s143 = ssub.s32 %s9, 1
      %s144 = smul.u32 64, %s14
      %p145 = scmp.lt.s32.totalorder %s144, 127
      %s146 = scalar_select %p145, %s144, 127
      %s147 = smul.addr %s146, 8
      %s148 = scalar_lea.vmem %s0, %s147
      %p149 = pneg %p35
      %p150 = pneg %p32
      %p151 = pneg %p56
      %p152 = pneg %p53
      %p153 = pneg %p77
      %p154 = pneg %p74
      %p155 = pneg %p103
      %p156 = pneg %p100
      %s157 = smul.u32 64, %s14
      %p158 = scmp.lt.s32.totalorder %s157, 127
      %s159 = scalar_select %p158, %s157, 127
      %s160 = smul.addr %s159, 8
      %s161 = scalar_lea.vmem %s3, %s160
      %s162 = smul.u32 64, %s14
      %p163 = scmp.lt.s32.totalorder %s162, 127
      %s164 = scalar_select %p163, %s162, 127
      %s165 = smul.addr %s164, 8
      %s166 = scalar_lea.vmem %s0, %s165
      %s167 = smul.u32 64, %s14
      %s168 = smul.u32 64, %s14
      %p169 = scmp.lt.s32.totalorder %s168, 127
      %s170 = scalar_select %p169, %s168, 127
      %s171 = smul.addr %s170, 8
      %s172 = scalar_lea.vmem %s3, %s171
      %s173 = smul.u32 64, %s14
      %v175 = vld [vmem:[%s166] sm:$0xff]
      %v176 = vld [vmem:[%s166 + $0x8] sm:$0xff]
      %v177 = vld [vmem:[%s166 + $0x10] sm:$0xff]
      %v178 = vld [vmem:[%s166 + $0x18] sm:$0xff]
      %v179 = vld [vmem:[%s166 + $0x20] sm:$0xff]
      %v180 = vld [vmem:[%s166 + $0x28] sm:$0xff]
      %v181 = vld [vmem:[%s166 + $0x30] sm:$0xff]
      %v182 = vld [vmem:[%s166 + $0x38] sm:$0xff]
      %v183 = vld [vmem:[%s166 + $0x40] sm:$0xff]
      %v184 = vld [vmem:[%s166 + $0x48] sm:$0xff]
      %v185 = vld [vmem:[%s166 + $0x50] sm:$0xff]
      %v186 = vld [vmem:[%s166 + $0x58] sm:$0xff]
      %v187 = vld [vmem:[%s166 + $0x60] sm:$0xff]
      %v188 = vld [vmem:[%s166 + $0x68] sm:$0xff]
      %v189 = vld [vmem:[%s166 + $0x70] sm:$0xff]
      %v190 = vld [vmem:[%s166 + $0x78] sm:$0xff]
      %v191 = vld [vmem:[%s166 + $0x80] sm:$0xff]
      %v192 = vld [vmem:[%s166 + $0x88] sm:$0xff]
      %v193 = vld [vmem:[%s166 + $0x90] sm:$0xff]
      %v194 = vld [vmem:[%s166 + $0x98] sm:$0xff]
      %v195 = vld [vmem:[%s166 + $0xa0] sm:$0xff]
      %v196 = vld [vmem:[%s166 + $0xa8] sm:$0xff]
      %v197 = vld [vmem:[%s166 + $0xb0] sm:$0xff]
      %v198 = vld [vmem:[%s166 + $0xb8] sm:$0xff]
      %v199 = vld [vmem:[%s166 + $0xc0] sm:$0xff]
      %v200 = vld [vmem:[%s166 + $0xc8] sm:$0xff]
      %v201 = vld [vmem:[%s166 + $0xd0] sm:$0xff]
      %v202 = vld [vmem:[%s166 + $0xd8] sm:$0xff]
      %v203 = vld [vmem:[%s166 + $0xe0] sm:$0xff]
      %v204 = vld [vmem:[%s166 + $0xe8] sm:$0xff]
      %v205 = vld [vmem:[%s166 + $0xf0] sm:$0xff]
      %v206 = vld [vmem:[%s166 + $0xf8] sm:$0xff]
      %v207 = vld [vmem:[%s166 + $0x100] sm:$0xff]
      %v208 = vld [vmem:[%s166 + $0x108] sm:$0xff]
      %v209 = vld [vmem:[%s166 + $0x110] sm:$0xff]
      %v210 = vld [vmem:[%s166 + $0x118] sm:$0xff]
      %v211 = vld [vmem:[%s166 + $0x120] sm:$0xff]
      %v212 = vld [vmem:[%s166 + $0x128] sm:$0xff]
      %v213 = vld [vmem:[%s166 + $0x130] sm:$0xff]
      %v214 = vld [vmem:[%s166 + $0x138] sm:$0xff]
      %v215 = vld [vmem:[%s166 + $0x140] sm:$0xff]
      %v216 = vld [vmem:[%s166 + $0x148] sm:$0xff]
      %v217 = vld [vmem:[%s166 + $0x150] sm:$0xff]
      %v218 = vld [vmem:[%s166 + $0x158] sm:$0xff]
      %v219 = vld [vmem:[%s166 + $0x160] sm:$0xff]
      %v220 = vld [vmem:[%s166 + $0x168] sm:$0xff]
      %v221 = vld [vmem:[%s166 + $0x170] sm:$0xff]
      %v222 = vld [vmem:[%s166 + $0x178] sm:$0xff]
      %v223 = vld [vmem:[%s166 + $0x180] sm:$0xff]
      %v224 = vld [vmem:[%s166 + $0x188] sm:$0xff]
      %v225 = vld [vmem:[%s166 + $0x190] sm:$0xff]
      %v226 = vld [vmem:[%s166 + $0x198] sm:$0xff]
      %v227 = vld [vmem:[%s166 + $0x1a0] sm:$0xff]
      %v228 = vld [vmem:[%s166 + $0x1a8] sm:$0xff]
      %v229 = vld [vmem:[%s166 + $0x1b0] sm:$0xff]
      %v230 = vld [vmem:[%s166 + $0x1b8] sm:$0xff]
      %v231 = vld [vmem:[%s166 + $0x1c0] sm:$0xff]
      %v232 = vld [vmem:[%s166 + $0x1c8] sm:$0xff]
      %v233 = vld [vmem:[%s166 + $0x1d0] sm:$0xff]
      %v234 = vld [vmem:[%s166 + $0x1d8] sm:$0xff]
      %v235 = vld [vmem:[%s166 + $0x1e0] sm:$0xff]
      %v236 = vld [vmem:[%s166 + $0x1e8] sm:$0xff]
      %v237 = vld [vmem:[%s166 + $0x1f0] sm:$0xff]
      %v238 = vld [vmem:[%s166 + $0x1f8] sm:$0xff]
      %v239 = vpack.c.bf16 %v176, %v175
      %v240 = vpack.c.bf16 %v178, %v177
      %v241 = vpack.c.bf16 %v180, %v179
      %v242 = vpack.c.bf16 %v182, %v181
      %v243 = vpack.c.bf16 %v184, %v183
      %v244 = vpack.c.bf16 %v186, %v185
      %v245 = vpack.c.bf16 %v188, %v187
      %v246 = vpack.c.bf16 %v190, %v189
      %v247 = vpack.c.bf16 %v192, %v191
      %v248 = vpack.c.bf16 %v194, %v193
      %v249 = vpack.c.bf16 %v196, %v195
      %v250 = vpack.c.bf16 %v198, %v197
      %v251 = vpack.c.bf16 %v200, %v199
      %v252 = vpack.c.bf16 %v202, %v201
      %v253 = vpack.c.bf16 %v204, %v203
      %v254 = vpack.c.bf16 %v206, %v205
      %v255 = vpack.c.bf16 %v208, %v207
      %v256 = vpack.c.bf16 %v210, %v209
      %v257 = vpack.c.bf16 %v212, %v211
      %v258 = vpack.c.bf16 %v214, %v213
      %v259 = vpack.c.bf16 %v216, %v215
      %v260 = vpack.c.bf16 %v218, %v217
      %v261 = vpack.c.bf16 %v220, %v219
      %v262 = vpack.c.bf16 %v222, %v221
      %v263 = vpack.c.bf16 %v224, %v223
      %v264 = vpack.c.bf16 %v226, %v225
      %v265 = vpack.c.bf16 %v228, %v227
      %v266 = vpack.c.bf16 %v230, %v229
      %v267 = vpack.c.bf16 %v232, %v231
      %v268 = vpack.c.bf16 %v234, %v233
      %v269 = vpack.c.bf16 %v236, %v235
      %v270 = vpack.c.bf16 %v238, %v237
      %v271 = vld [vmem:[%s1] sm:$0xf]
      %v272 = vld [vmem:[%s1 + $0x4] sm:$0xf]
      %v273 = vld [vmem:[%s1 + $0x8] sm:$0xf]
      %v274 = vld [vmem:[%s1 + $0xc] sm:$0xf]
      %v275 = vld [vmem:[%s2] sm:$0x1]
      %v277 = vlaneseq
      %v278 = vshrl.u32 %v277, 7
      %v279 = vsub.s32 0, %v278
      %v280 = vrot.slane %v275, %v279
      %v286 = vunpack.c.l.b16 %v271
      %v287 = vunpack.c.l.b16 %v272
      %v288 = vunpack.c.l.b16 %v273
      %v289 = vunpack.c.l.b16 %v274
      %v290 = vpack.c.b16 %v287, %v286
      %v291 = vpack.c.b16 %v289, %v288
      %vm294 = vcmask 261120
      %v296 = vsel %vm294, %v239, 0
      %v299 = vsel %vm294, %v240, 0
      %v302 = vsel %vm294, %v241, 0
      %v305 = vsel %vm294, %v242, 0
      %v308 = vsel %vm294, %v243, 0
      %v311 = vsel %vm294, %v244, 0
      %v314 = vsel %vm294, %v245, 0
      %v317 = vsel %vm294, %v246, 0
      %v320 = vsel %vm294, %v247, 0
      %v323 = vsel %vm294, %v248, 0
      %v326 = vsel %vm294, %v249, 0
      %v329 = vsel %vm294, %v250, 0
      %v332 = vsel %vm294, %v251, 0
      %v335 = vsel %vm294, %v252, 0
      %v338 = vsel %vm294, %v253, 0
      %v341 = vsel %vm294, %v254, 0
      %v344 = vsel %vm294, %v255, 0
      %v347 = vsel %vm294, %v256, 0
      %v350 = vsel %vm294, %v257, 0
      %v353 = vsel %vm294, %v258, 0
      %v356 = vsel %vm294, %v259, 0
      %v359 = vsel %vm294, %v260, 0
      %v362 = vsel %vm294, %v261, 0
      %v365 = vsel %vm294, %v262, 0
      %v368 = vsel %vm294, %v263, 0
      %v371 = vsel %vm294, %v264, 0
      %v374 = vsel %vm294, %v265, 0
      %v377 = vsel %vm294, %v266, 0
      %v380 = vsel %vm294, %v267, 0
      %v383 = vsel %vm294, %v268, 0
      %v386 = vsel %vm294, %v269, 0
      %v389 = vsel %vm294, %v270, 0
      %391 = vmatprep.subr.bf16.mxu0 0
      %392 = vmatpush1.bf16.msra.mxu0 %v290
      %393 = vmatprep.subr.bf16.mxu0 0
      %394 = vmatpush1.bf16.msra.mxu0 %v291
      %395 = vmatprep.subr.bf16.mxu0 0
      %396 = vmatpush1.bf16.msra.mxu0 0
      %397 = vmatprep.subr.bf16.mxu0 0
      %398 = vmatpush1.bf16.msra.mxu0 0
      %399 = vmatprep.subr.bf16.mxu0 0
      %400 = vmatpush1.bf16.msra.mxu0 0
      %401 = vmatprep.subr.bf16.mxu0 0
      %402 = vmatpush1.bf16.msra.mxu0 0
      %403 = vmatprep.subr.bf16.mxu0 0
      %404 = vmatpush1.bf16.msra.mxu0 0
      %405 = vmatprep.subr.bf16.mxu0 0
      %406 = vmatpush1.bf16.msra.mxu0 0
      %407 = vmatprep.subr.bf16.mxu0 0
      %408 = vmatpush1.bf16.msra.mxu0 0
      %409 = vmatprep.subr.bf16.mxu0 0
      %410 = vmatpush1.bf16.msra.mxu0 0
      %411 = vmatprep.subr.bf16.mxu0 0
      %412 = vmatpush1.bf16.msra.mxu0 0
      %413 = vmatprep.subr.bf16.mxu0 0
      %414 = vmatpush1.bf16.msra.mxu0 0
      %415 = vmatprep.subr.bf16.mxu0 0
      %416 = vmatpush1.bf16.msra.mxu0 0
      %417 = vmatprep.subr.bf16.mxu0 0
      %418 = vmatpush1.bf16.msra.mxu0 0
      %419 = vmatprep.subr.bf16.mxu0 0
      %420 = vmatpush1.bf16.msra.mxu0 0
      %421 = vmatprep.subr.bf16.mxu0 0
      %422 = vmatpush1.bf16.msra.mxu0 0
      %423 = vmatprep.mubr.bf16.mxu0 0
      %424 = vmatmul.mubr.bf16.gmra.mrb[0].mxu0 %v296
      %v425 = vpop.f32.mrb[0].mxu0
      %v426 = vadd.f32 %v280, %v425
      %v427 = vpop.f32.mrb[0].mxu0
      %v428 = vpop.f32.mrb[0].mxu0
      %v429 = vadd.f32 %v280, %v428
      %v430 = vpop.f32.mrb[0].mxu0
      %431 = vmatprep.mubr.bf16.mxu0 0
      %432 = vmatmul.mubr.bf16.gmra.mrb[0].mxu0 %v299
      %v433 = vpop.f32.mrb[0].mxu0
      %v434 = vadd.f32 %v280, %v433
      %v435 = vpop.f32.mrb[0].mxu0
      %v436 = vpop.f32.mrb[0].mxu0
      %v437 = vadd.f32 %v280, %v436
      %v438 = vpop.f32.mrb[0].mxu0
      %439 = vmatprep.mubr.bf16.mxu0 0
      %440 = vmatmul.mubr.bf16.gmra.mrb[0].mxu0 %v302
      %v441 = vpop.f32.mrb[0].mxu0
      %v442 = vadd.f32 %v280, %v441
      %v443 = vpop.f32.mrb[0].mxu0
      %v444 = vpop.f32.mrb[0].mxu0
      %v445 = vadd.f32 %v280, %v444
      %v446 = vpop.f32.mrb[0].mxu0
      %447 = vmatprep.mubr.bf16.mxu0 0
      %448 = vmatmul.mubr.bf16.gmra.mrb[0].mxu0 %v305
      %v449 = vpop.f32.mrb[0].mxu0
      %v450 = vadd.f32 %v280, %v449
      %v451 = vpop.f32.mrb[0].mxu0
      %v452 = vpop.f32.mrb[0].mxu0
      %v453 = vadd.f32 %v280, %v452
      %v454 = vpop.f32.mrb[0].mxu0
      %455 = vmatprep.mubr.bf16.mxu0 0
      %456 = vmatmul.mubr.bf16.gmra.mrb[0].mxu0 %v308
      %v457 = vpop.f32.mrb[0].mxu0
      %v458 = vadd.f32 %v280, %v457
      %v459 = vpop.f32.mrb[0].mxu0
      %v460 = vpop.f32.mrb[0].mxu0
      %v461 = vadd.f32 %v280, %v460
      %v462 = vpop.f32.mrb[0].mxu0
      %463 = vmatprep.mubr.bf16.mxu0 0
      %464 = vmatmul.mubr.bf16.gmra.mrb[0].mxu0 %v311
      %v465 = vpop.f32.mrb[0].mxu0
      %v466 = vadd.f32 %v280, %v465
      %v467 = vpop.f32.mrb[0].mxu0
      %v468 = vpop.f32.mrb[0].mxu0
      %v469 = vadd.f32 %v280, %v468
      %v470 = vpop.f32.mrb[0].mxu0
      %471 = vmatprep.mubr.bf16.mxu0 0
      %472 = vmatmul.mubr.bf16.gmra.mrb[0].mxu0 %v314
      %v473 = vpop.f32.mrb[0].mxu0
      %v474 = vadd.f32 %v280, %v473
      %v475 = vpop.f32.mrb[0].mxu0
      %v476 = vpop.f32.mrb[0].mxu0
      %v477 = vadd.f32 %v280, %v476
      %v478 = vpop.f32.mrb[0].mxu0
      %479 = vmatprep.mubr.bf16.mxu0 0
      %480 = vmatmul.mubr.bf16.gmra.mrb[0].mxu0 %v317
      %v481 = vpop.f32.mrb[0].mxu0
      %v482 = vadd.f32 %v280, %v481
      %v483 = vpop.f32.mrb[0].mxu0
      %v484 = vpop.f32.mrb[0].mxu0
      %v485 = vadd.f32 %v280, %v484
      %v486 = vpop.f32.mrb[0].mxu0
      %487 = vmatprep.mubr.bf16.mxu0 0
      %488 = vmatmul.mubr.bf16.gmra.mrb[0].mxu0 %v320
      %v489 = vpop.f32.mrb[0].mxu0
      %v490 = vadd.f32 %v280, %v489
      %v491 = vpop.f32.mrb[0].mxu0
      %v492 = vpop.f32.mrb[0].mxu0
      %v493 = vadd.f32 %v280, %v492
      %v494 = vpop.f32.mrb[0].mxu0
      %495 = vmatprep.mubr.bf16.mxu0 0
      %496 = vmatmul.mubr.bf16.gmra.mrb[0].mxu0 %v323
      %v497 = vpop.f32.mrb[0].mxu0
      %v498 = vadd.f32 %v280, %v497
      %v499 = vpop.f32.mrb[0].mxu0
      %v500 = vpop.f32.mrb[0].mxu0
      %v501 = vadd.f32 %v280, %v500
      %v502 = vpop.f32.mrb[0].mxu0
      %503 = vmatprep.mubr.bf16.mxu0 0
      %504 = vmatmul.mubr.bf16.gmra.mrb[0].mxu0 %v326
      %v505 = vpop.f32.mrb[0].mxu0
      %v506 = vadd.f32 %v280, %v505
      %v507 = vpop.f32.mrb[0].mxu0
      %v508 = vpop.f32.mrb[0].mxu0
      %v509 = vadd.f32 %v280, %v508
      %v510 = vpop.f32.mrb[0].mxu0
      %511 = vmatprep.mubr.bf16.mxu0 0
      %512 = vmatmul.mubr.bf16.gmra.mrb[0].mxu0 %v329
      %v513 = vpop.f32.mrb[0].mxu0
      %v514 = vadd.f32 %v280, %v513
      %v515 = vpop.f32.mrb[0].mxu0
      %v516 = vpop.f32.mrb[0].mxu0
      %v517 = vadd.f32 %v280, %v516
      %v518 = vpop.f32.mrb[0].mxu0
      %519 = vmatprep.mubr.bf16.mxu0 0
      %520 = vmatmul.mubr.bf16.gmra.mrb[0].mxu0 %v332
      %v521 = vpop.f32.mrb[0].mxu0
      %v522 = vadd.f32 %v280, %v521
      %v523 = vpop.f32.mrb[0].mxu0
      %v524 = vpop.f32.mrb[0].mxu0
      %v525 = vadd.f32 %v280, %v524
      %v526 = vpop.f32.mrb[0].mxu0
      %527 = vmatprep.mubr.bf16.mxu0 0
      %528 = vmatmul.mubr.bf16.gmra.mrb[0].mxu0 %v335
      %v529 = vpop.f32.mrb[0].mxu0
      %v530 = vadd.f32 %v280, %v529
      %v531 = vpop.f32.mrb[0].mxu0
      %v532 = vpop.f32.mrb[0].mxu0
      %v533 = vadd.f32 %v280, %v532
      %v534 = vpop.f32.mrb[0].mxu0
      %535 = vmatprep.mubr.bf16.mxu0 0
      %536 = vmatmul.mubr.bf16.gmra.mrb[0].mxu0 %v338
      %v537 = vpop.f32.mrb[0].mxu0
      %v538 = vadd.f32 %v280, %v537
      %v539 = vpop.f32.mrb[0].mxu0
      %v540 = vpop.f32.mrb[0].mxu0
      %v541 = vadd.f32 %v280, %v540
      %v542 = vpop.f32.mrb[0].mxu0
      %543 = vmatprep.mubr.bf16.mxu0 0
      %544 = vmatmul.mubr.bf16.gmra.mrb[0].mxu0 %v341
      %v545 = vpop.f32.mrb[0].mxu0
      %v546 = vadd.f32 %v280, %v545
      %v547 = vpop.f32.mrb[0].mxu0
      %v548 = vpop.f32.mrb[0].mxu0
      %v549 = vadd.f32 %v280, %v548
      %v550 = vpop.f32.mrb[0].mxu0
      %551 = vmatprep.mubr.bf16.mxu0 0
      %552 = vmatmul.mubr.bf16.gmra.mrb[0].mxu0 %v344
      %v553 = vpop.f32.mrb[0].mxu0
      %v554 = vadd.f32 %v280, %v553
      %v555 = vpop.f32.mrb[0].mxu0
      %v556 = vpop.f32.mrb[0].mxu0
      %v557 = vadd.f32 %v280, %v556
      %v558 = vpop.f32.mrb[0].mxu0
      %559 = vmatprep.mubr.bf16.mxu0 0
      %560 = vmatmul.mubr.bf16.gmra.mrb[0].mxu0 %v347
      %v561 = vpop.f32.mrb[0].mxu0
      %v562 = vadd.f32 %v280, %v561
      %v563 = vpop.f32.mrb[0].mxu0
      %v564 = vpop.f32.mrb[0].mxu0
      %v565 = vadd.f32 %v280, %v564
      %v566 = vpop.f32.mrb[0].mxu0
      %567 = vmatprep.mubr.bf16.mxu0 0
      %568 = vmatmul.mubr.bf16.gmra.mrb[0].mxu0 %v350
      %v569 = vpop.f32.mrb[0].mxu0
      %v570 = vadd.f32 %v280, %v569
      %v571 = vpop.f32.mrb[0].mxu0
      %v572 = vpop.f32.mrb[0].mxu0
      %v573 = vadd.f32 %v280, %v572
      %v574 = vpop.f32.mrb[0].mxu0
      %575 = vmatprep.mubr.bf16.mxu0 0
      %576 = vmatmul.mubr.bf16.gmra.mrb[0].mxu0 %v353
      %v577 = vpop.f32.mrb[0].mxu0
      %v578 = vadd.f32 %v280, %v577
      %v579 = vpop.f32.mrb[0].mxu0
      %v580 = vpop.f32.mrb[0].mxu0
      %v581 = vadd.f32 %v280, %v580
      %v582 = vpop.f32.mrb[0].mxu0
      %583 = vmatprep.mubr.bf16.mxu0 0
      %584 = vmatmul.mubr.bf16.gmra.mrb[0].mxu0 %v356
      %v585 = vpop.f32.mrb[0].mxu0
      %v586 = vadd.f32 %v280, %v585
      %v587 = vpop.f32.mrb[0].mxu0
      %v588 = vpop.f32.mrb[0].mxu0
      %v589 = vadd.f32 %v280, %v588
      %v590 = vpop.f32.mrb[0].mxu0
      %591 = vmatprep.mubr.bf16.mxu0 0
      %592 = vmatmul.mubr.bf16.gmra.mrb[0].mxu0 %v359
      %v593 = vpop.f32.mrb[0].mxu0
      %v594 = vadd.f32 %v280, %v593
      %v595 = vpop.f32.mrb[0].mxu0
      %v596 = vpop.f32.mrb[0].mxu0
      %v597 = vadd.f32 %v280, %v596
      %v598 = vpop.f32.mrb[0].mxu0
      %599 = vmatprep.mubr.bf16.mxu0 0
      %600 = vmatmul.mubr.bf16.gmra.mrb[0].mxu0 %v362
      %v601 = vpop.f32.mrb[0].mxu0
      %v602 = vadd.f32 %v280, %v601
      %v603 = vpop.f32.mrb[0].mxu0
      %v604 = vpop.f32.mrb[0].mxu0
      %v605 = vadd.f32 %v280, %v604
      %v606 = vpop.f32.mrb[0].mxu0
      %607 = vmatprep.mubr.bf16.mxu0 0
      %608 = vmatmul.mubr.bf16.gmra.mrb[0].mxu0 %v365
      %v609 = vpop.f32.mrb[0].mxu0
      %v610 = vadd.f32 %v280, %v609
      %v611 = vpop.f32.mrb[0].mxu0
      %v612 = vpop.f32.mrb[0].mxu0
      %v613 = vadd.f32 %v280, %v612
      %v614 = vpop.f32.mrb[0].mxu0
      %615 = vmatprep.mubr.bf16.mxu0 0
      %616 = vmatmul.mubr.bf16.gmra.mrb[0].mxu0 %v368
      %v617 = vpop.f32.mrb[0].mxu0
      %v618 = vadd.f32 %v280, %v617
      %v619 = vpop.f32.mrb[0].mxu0
      %v620 = vpop.f32.mrb[0].mxu0
      %v621 = vadd.f32 %v280, %v620
      %v622 = vpop.f32.mrb[0].mxu0
      %623 = vmatprep.mubr.bf16.mxu0 0
      %624 = vmatmul.mubr.bf16.gmra.mrb[0].mxu0 %v371
      %v625 = vpop.f32.mrb[0].mxu0
      %v626 = vadd.f32 %v280, %v625
      %v627 = vpop.f32.mrb[0].mxu0
      %v628 = vpop.f32.mrb[0].mxu0
      %v629 = vadd.f32 %v280, %v628
      %v630 = vpop.f32.mrb[0].mxu0
      %631 = vmatprep.mubr.bf16.mxu0 0
      %632 = vmatmul.mubr.bf16.gmra.mrb[0].mxu0 %v374
      %v633 = vpop.f32.mrb[0].mxu0
      %v634 = vadd.f32 %v280, %v633
      %v635 = vpop.f32.mrb[0].mxu0
      %v636 = vpop.f32.mrb[0].mxu0
      %v637 = vadd.f32 %v280, %v636
      %v638 = vpop.f32.mrb[0].mxu0
      %639 = vmatprep.mubr.bf16.mxu0 0
      %640 = vmatmul.mubr.bf16.gmra.mrb[0].mxu0 %v377
      %v641 = vpop.f32.mrb[0].mxu0
      %v642 = vadd.f32 %v280, %v641
      %v643 = vpop.f32.mrb[0].mxu0
      %v644 = vpop.f32.mrb[0].mxu0
      %v645 = vadd.f32 %v280, %v644
      %v646 = vpop.f32.mrb[0].mxu0
      %647 = vmatprep.mubr.bf16.mxu0 0
      %648 = vmatmul.mubr.bf16.gmra.mrb[0].mxu0 %v380
      %v649 = vpop.f32.mrb[0].mxu0
      %v650 = vadd.f32 %v280, %v649
      %v651 = vpop.f32.mrb[0].mxu0
      %v652 = vpop.f32.mrb[0].mxu0
      %v653 = vadd.f32 %v280, %v652
      %v654 = vpop.f32.mrb[0].mxu0
      %655 = vmatprep.mubr.bf16.mxu0 0
      %656 = vmatmul.mubr.bf16.gmra.mrb[0].mxu0 %v383
      %v657 = vpop.f32.mrb[0].mxu0
      %v658 = vadd.f32 %v280, %v657
      %v659 = vpop.f32.mrb[0].mxu0
      %v660 = vpop.f32.mrb[0].mxu0
      %v661 = vadd.f32 %v280, %v660
      %v662 = vpop.f32.mrb[0].mxu0
      %663 = vmatprep.mubr.bf16.mxu0 0
      %664 = vmatmul.mubr.bf16.gmra.mrb[0].mxu0 %v386
      %v665 = vpop.f32.mrb[0].mxu0
      %v666 = vadd.f32 %v280, %v665
      %v667 = vpop.f32.mrb[0].mxu0
      %v668 = vpop.f32.mrb[0].mxu0
      %v669 = vadd.f32 %v280, %v668
      %v670 = vpop.f32.mrb[0].mxu0
      %671 = vmatprep.mubr.bf16.mxu0 0
      %672 = vmatmul.mubr.bf16.gmra.mrb[0].mxu0 %v389
      %v673 = vpop.f32.mrb[0].mxu0
      %v674 = vadd.f32 %v280, %v673
      %v675 = vpop.f32.mrb[0].mxu0
      %v676 = vpop.f32.mrb[0].mxu0
      %v677 = vadd.f32 %v280, %v676
      %v678 = vpop.f32.mrb[0].mxu0
      %679 = vdwg.mxu0
      %v680 = vmax.f32 %v426, 0.0
      %v681 = vmax.f32 %v429, 0.0
      %v682 = vmax.f32 %v434, 0.0
      %v683 = vmax.f32 %v437, 0.0
      %v684 = vmax.f32 %v442, 0.0
      %v685 = vmax.f32 %v445, 0.0
      %v686 = vmax.f32 %v450, 0.0
      %v687 = vmax.f32 %v453, 0.0
      %v688 = vmax.f32 %v458, 0.0
      %v689 = vmax.f32 %v461, 0.0
      %v690 = vmax.f32 %v466, 0.0
      %v691 = vmax.f32 %v469, 0.0
      %v692 = vmax.f32 %v474, 0.0
      %v693 = vmax.f32 %v477, 0.0
      %v694 = vmax.f32 %v482, 0.0
      %v695 = vmax.f32 %v485, 0.0
      %v696 = vmax.f32 %v490, 0.0
      %v697 = vmax.f32 %v493, 0.0
      %v698 = vmax.f32 %v498, 0.0
      %v699 = vmax.f32 %v501, 0.0
      %v700 = vmax.f32 %v506, 0.0
      %v701 = vmax.f32 %v509, 0.0
      %v702 = vmax.f32 %v514, 0.0
      %v703 = vmax.f32 %v517, 0.0
      %v704 = vmax.f32 %v522, 0.0
      %v705 = vmax.f32 %v525, 0.0
      %v706 = vmax.f32 %v530, 0.0
      %v707 = vmax.f32 %v533, 0.0
      %v708 = vmax.f32 %v538, 0.0
      %v709 = vmax.f32 %v541, 0.0
      %v710 = vmax.f32 %v546, 0.0
      %v711 = vmax.f32 %v549, 0.0
      %v712 = vmax.f32 %v554, 0.0
      %v713 = vmax.f32 %v557, 0.0
      %v714 = vmax.f32 %v562, 0.0
      %v715 = vmax.f32 %v565, 0.0
      %v716 = vmax.f32 %v570, 0.0
      %v717 = vmax.f32 %v573, 0.0
      %v718 = vmax.f32 %v578, 0.0
      %v719 = vmax.f32 %v581, 0.0
      %v720 = vmax.f32 %v586, 0.0
      %v721 = vmax.f32 %v589, 0.0
      %v722 = vmax.f32 %v594, 0.0
      %v723 = vmax.f32 %v597, 0.0
      %v724 = vmax.f32 %v602, 0.0
      %v725 = vmax.f32 %v605, 0.0
      %v726 = vmax.f32 %v610, 0.0
      %v727 = vmax.f32 %v613, 0.0
      %v728 = vmax.f32 %v618, 0.0
      %v729 = vmax.f32 %v621, 0.0
      %v730 = vmax.f32 %v626, 0.0
      %v731 = vmax.f32 %v629, 0.0
      %v732 = vmax.f32 %v634, 0.0
      %v733 = vmax.f32 %v637, 0.0
      %v734 = vmax.f32 %v642, 0.0
      %v735 = vmax.f32 %v645, 0.0
      %v736 = vmax.f32 %v650, 0.0
      %v737 = vmax.f32 %v653, 0.0
      %v738 = vmax.f32 %v658, 0.0
      %v739 = vmax.f32 %v661, 0.0
      %v740 = vmax.f32 %v666, 0.0
      %v741 = vmax.f32 %v669, 0.0
      %v742 = vmax.f32 %v674, 0.0
      %v743 = vmax.f32 %v677, 0.0
      %v744 = vpack.c.bf16 %v681, %v680
      %v745 = vpack.c.bf16 %v683, %v682
      %v746 = vpack.c.bf16 %v685, %v684
      %v747 = vpack.c.bf16 %v687, %v686
      %v748 = vpack.c.bf16 %v689, %v688
      %v749 = vpack.c.bf16 %v691, %v690
      %v750 = vpack.c.bf16 %v693, %v692
      %v751 = vpack.c.bf16 %v695, %v694
      %v752 = vpack.c.bf16 %v697, %v696
      %v753 = vpack.c.bf16 %v699, %v698
      %v754 = vpack.c.bf16 %v701, %v700
      %v755 = vpack.c.bf16 %v703, %v702
      %v756 = vpack.c.bf16 %v705, %v704
      %v757 = vpack.c.bf16 %v707, %v706
      %v758 = vpack.c.bf16 %v709, %v708
      %v759 = vpack.c.bf16 %v711, %v710
      %v760 = vpack.c.bf16 %v713, %v712
      %v761 = vpack.c.bf16 %v715, %v714
      %v762 = vpack.c.bf16 %v717, %v716
      %v763 = vpack.c.bf16 %v719, %v718
      %v764 = vpack.c.bf16 %v721, %v720
      %v765 = vpack.c.bf16 %v723, %v722
      %v766 = vpack.c.bf16 %v725, %v724
      %v767 = vpack.c.bf16 %v727, %v726
      %v768 = vpack.c.bf16 %v729, %v728
      %v769 = vpack.c.bf16 %v731, %v730
      %v770 = vpack.c.bf16 %v733, %v732
      %v771 = vpack.c.bf16 %v735, %v734
      %v772 = vpack.c.bf16 %v737, %v736
      %v773 = vpack.c.bf16 %v739, %v738
      %v774 = vpack.c.bf16 %v741, %v740
      %v775 = vpack.c.bf16 %v743, %v742
      %s776 = scalar_lea.vmem %s1, 64
      %v777 = vld [vmem:[%s776] sm:$0xf]
      %v778 = vld [vmem:[%s776 + $0x4] sm:$0xf]
      %v779 = vld [vmem:[%s776 + $0x8] sm:$0xf]
      %v780 = vld [vmem:[%s776 + $0xc] sm:$0xf]
      %v781 = vld [vmem:[%s776 + $0x10] sm:$0xf]
      %v782 = vld [vmem:[%s776 + $0x14] sm:$0xf]
      %v783 = vld [vmem:[%s776 + $0x18] sm:$0xf]
      %v784 = vld [vmem:[%s776 + $0x1c] sm:$0xf]
      %v785 = vld [vmem:[%s776 + $0x20] sm:$0xf]
      %v786 = vld [vmem:[%s776 + $0x24] sm:$0xf]
      %v787 = vld [vmem:[%s776 + $0x28] sm:$0xf]
      %v788 = vld [vmem:[%s776 + $0x2c] sm:$0xf]
      %v789 = vld [vmem:[%s776 + $0x30] sm:$0xf]
      %v790 = vld [vmem:[%s776 + $0x34] sm:$0xf]
      %v791 = vld [vmem:[%s776 + $0x38] sm:$0xf]
      %v792 = vld [vmem:[%s776 + $0x3c] sm:$0xf]
      %s793 = scalar_lea.vmem %s2, 1
      %v794 = vld [vmem:[%s793] sm:$0x1]
      %v796 = vlaneseq
      %v797 = vshrl.u32 %v796, 7
      %v798 = vsub.s32 0, %v797
      %v799 = vrot.slane %v794, %v798
      %v817 = vunpack.c.l.b16 %v777
      %v818 = vunpack.c.l.b16 %v778
      %v819 = vunpack.c.l.b16 %v779
      %v820 = vunpack.c.l.b16 %v780
      %v821 = vunpack.c.l.b16 %v781
      %v822 = vunpack.c.l.b16 %v782
      %v823 = vunpack.c.l.b16 %v783
      %v824 = vunpack.c.l.b16 %v784
      %v825 = vunpack.c.l.b16 %v785
      %v826 = vunpack.c.l.b16 %v786
      %v827 = vunpack.c.l.b16 %v787
      %v828 = vunpack.c.l.b16 %v788
      %v829 = vunpack.c.l.b16 %v789
      %v830 = vunpack.c.l.b16 %v790
      %v831 = vunpack.c.l.b16 %v791
      %v832 = vunpack.c.l.b16 %v792
      %v833 = vpack.c.b16 %v818, %v817
      %v834 = vpack.c.b16 %v820, %v819
      %v835 = vpack.c.b16 %v822, %v821
      %v836 = vpack.c.b16 %v824, %v823
      %v837 = vpack.c.b16 %v826, %v825
      %v838 = vpack.c.b16 %v828, %v827
      %v839 = vpack.c.b16 %v830, %v829
      %v840 = vpack.c.b16 %v832, %v831
      %849 = vmatprep.subr.bf16.mxu0 0
      %850 = vmatpush1.bf16.msra.mxu0 %v833
      %851 = vmatprep.subr.bf16.mxu0 0
      %852 = vmatpush1.bf16.msra.mxu0 %v834
      %853 = vmatprep.subr.bf16.mxu0 0
      %854 = vmatpush1.bf16.msra.mxu0 %v835
      %855 = vmatprep.subr.bf16.mxu0 0
      %856 = vmatpush1.bf16.msra.mxu0 %v836
      %857 = vmatprep.subr.bf16.mxu0 0
      %858 = vmatpush1.bf16.msra.mxu0 %v837
      %859 = vmatprep.subr.bf16.mxu0 0
      %860 = vmatpush1.bf16.msra.mxu0 %v838
      %861 = vmatprep.subr.bf16.mxu0 0
      %862 = vmatpush1.bf16.msra.mxu0 %v839
      %863 = vmatprep.subr.bf16.mxu0 0
      %864 = vmatpush1.bf16.msra.mxu0 %v840
      %865 = vmatprep.subr.bf16.mxu0 0
      %866 = vmatpush1.bf16.msra.mxu0 0
      %867 = vmatprep.subr.bf16.mxu0 0
      %868 = vmatpush1.bf16.msra.mxu0 0
      %869 = vmatprep.subr.bf16.mxu0 0
      %870 = vmatpush1.bf16.msra.mxu0 0
      %871 = vmatprep.subr.bf16.mxu0 0
      %872 = vmatpush1.bf16.msra.mxu0 0
      %873 = vmatprep.subr.bf16.mxu0 0
      %874 = vmatpush1.bf16.msra.mxu0 0
      %875 = vmatprep.subr.bf16.mxu0 0
      %876 = vmatpush1.bf16.msra.mxu0 0
      %877 = vmatprep.subr.bf16.mxu0 0
      %878 = vmatpush1.bf16.msra.mxu0 0
      %879 = vmatprep.subr.bf16.mxu0 0
      %880 = vmatpush1.bf16.msra.mxu0 0
      %881 = vmatprep.mubr.bf16.mxu0 0
      %882 = vmatmul.mubr.bf16.gmra.mrb[0].mxu0 %v744
      %v883 = vpop.f32.mrb[0].mxu0
      %v884 = vadd.f32 %v799, %v883
      %v885 = vpop.f32.mrb[0].mxu0
      %v886 = vpop.f32.mrb[0].mxu0
      %v887 = vadd.f32 %v799, %v886
      %v888 = vpop.f32.mrb[0].mxu0
      %889 = vmatprep.mubr.bf16.mxu0 0
      %890 = vmatmul.mubr.bf16.gmra.mrb[0].mxu0 %v745
      %v891 = vpop.f32.mrb[0].mxu0
      %v892 = vadd.f32 %v799, %v891
      %v893 = vpop.f32.mrb[0].mxu0
      %v894 = vpop.f32.mrb[0].mxu0
      %v895 = vadd.f32 %v799, %v894
      %v896 = vpop.f32.mrb[0].mxu0
      %897 = vmatprep.mubr.bf16.mxu0 0
      %898 = vmatmul.mubr.bf16.gmra.mrb[0].mxu0 %v746
      %v899 = vpop.f32.mrb[0].mxu0
      %v900 = vadd.f32 %v799, %v899
      %v901 = vpop.f32.mrb[0].mxu0
      %v902 = vpop.f32.mrb[0].mxu0
      %v903 = vadd.f32 %v799, %v902
      %v904 = vpop.f32.mrb[0].mxu0
      %905 = vmatprep.mubr.bf16.mxu0 0
      %906 = vmatmul.mubr.bf16.gmra.mrb[0].mxu0 %v747
      %v907 = vpop.f32.mrb[0].mxu0
      %v908 = vadd.f32 %v799, %v907
      %v909 = vpop.f32.mrb[0].mxu0
      %v910 = vpop.f32.mrb[0].mxu0
      %v911 = vadd.f32 %v799, %v910
      %v912 = vpop.f32.mrb[0].mxu0
      %913 = vmatprep.mubr.bf16.mxu0 0
      %914 = vmatmul.mubr.bf16.gmra.mrb[0].mxu0 %v748
      %v915 = vpop.f32.mrb[0].mxu0
      %v916 = vadd.f32 %v799, %v915
      %v917 = vpop.f32.mrb[0].mxu0
      %v918 = vpop.f32.mrb[0].mxu0
      %v919 = vadd.f32 %v799, %v918
      %v920 = vpop.f32.mrb[0].mxu0
      %921 = vmatprep.mubr.bf16.mxu0 0
      %922 = vmatmul.mubr.bf16.gmra.mrb[0].mxu0 %v749
      %v923 = vpop.f32.mrb[0].mxu0
      %v924 = vadd.f32 %v799, %v923
      %v925 = vpop.f32.mrb[0].mxu0
      %v926 = vpop.f32.mrb[0].mxu0
      %v927 = vadd.f32 %v799, %v926
      %v928 = vpop.f32.mrb[0].mxu0
      %929 = vmatprep.mubr.bf16.mxu0 0
      %930 = vmatmul.mubr.bf16.gmra.mrb[0].mxu0 %v750
      %v931 = vpop.f32.mrb[0].mxu0
      %v932 = vadd.f32 %v799, %v931
      %v933 = vpop.f32.mrb[0].mxu0
      %v934 = vpop.f32.mrb[0].mxu0
      %v935 = vadd.f32 %v799, %v934
      %v936 = vpop.f32.mrb[0].mxu0
      %937 = vmatprep.mubr.bf16.mxu0 0
      %938 = vmatmul.mubr.bf16.gmra.mrb[0].mxu0 %v751
      %v939 = vpop.f32.mrb[0].mxu0
      %v940 = vadd.f32 %v799, %v939
      %v941 = vpop.f32.mrb[0].mxu0
      %v942 = vpop.f32.mrb[0].mxu0
      %v943 = vadd.f32 %v799, %v942
      %v944 = vpop.f32.mrb[0].mxu0
      %945 = vmatprep.mubr.bf16.mxu0 0
      %946 = vmatmul.mubr.bf16.gmra.mrb[0].mxu0 %v752
      %v947 = vpop.f32.mrb[0].mxu0
      %v948 = vadd.f32 %v799, %v947
      %v949 = vpop.f32.mrb[0].mxu0
      %v950 = vpop.f32.mrb[0].mxu0
      %v951 = vadd.f32 %v799, %v950
      %v952 = vpop.f32.mrb[0].mxu0
      %953 = vmatprep.mubr.bf16.mxu0 0
      %954 = vmatmul.mubr.bf16.gmra.mrb[0].mxu0 %v753
      %v955 = vpop.f32.mrb[0].mxu0
      %v956 = vadd.f32 %v799, %v955
      %v957 = vpop.f32.mrb[0].mxu0
      %v958 = vpop.f32.mrb[0].mxu0
      %v959 = vadd.f32 %v799, %v958
      %v960 = vpop.f32.mrb[0].mxu0
      %961 = vmatprep.mubr.bf16.mxu0 0
      %962 = vmatmul.mubr.bf16.gmra.mrb[0].mxu0 %v754
      %v963 = vpop.f32.mrb[0].mxu0
      %v964 = vadd.f32 %v799, %v963
      %v965 = vpop.f32.mrb[0].mxu0
      %v966 = vpop.f32.mrb[0].mxu0
      %v967 = vadd.f32 %v799, %v966
      %v968 = vpop.f32.mrb[0].mxu0
      %969 = vmatprep.mubr.bf16.mxu0 0
      %970 = vmatmul.mubr.bf16.gmra.mrb[0].mxu0 %v755
      %v971 = vpop.f32.mrb[0].mxu0
      %v972 = vadd.f32 %v799, %v971
      %v973 = vpop.f32.mrb[0].mxu0
      %v974 = vpop.f32.mrb[0].mxu0
      %v975 = vadd.f32 %v799, %v974
      %v976 = vpop.f32.mrb[0].mxu0
      %977 = vmatprep.mubr.bf16.mxu0 0
      %978 = vmatmul.mubr.bf16.gmra.mrb[0].mxu0 %v756
      %v979 = vpop.f32.mrb[0].mxu0
      %v980 = vadd.f32 %v799, %v979
      %v981 = vpop.f32.mrb[0].mxu0
      %v982 = vpop.f32.mrb[0].mxu0
      %v983 = vadd.f32 %v799, %v982
      %v984 = vpop.f32.mrb[0].mxu0
      %985 = vmatprep.mubr.bf16.mxu0 0
      %986 = vmatmul.mubr.bf16.gmra.mrb[0].mxu0 %v757
      %v987 = vpop.f32.mrb[0].mxu0
      %v988 = vadd.f32 %v799, %v987
      %v989 = vpop.f32.mrb[0].mxu0
      %v990 = vpop.f32.mrb[0].mxu0
      %v991 = vadd.f32 %v799, %v990
      %v992 = vpop.f32.mrb[0].mxu0
      %993 = vmatprep.mubr.bf16.mxu0 0
      %994 = vmatmul.mubr.bf16.gmra.mrb[0].mxu0 %v758
      %v995 = vpop.f32.mrb[0].mxu0
      %v996 = vadd.f32 %v799, %v995
      %v997 = vpop.f32.mrb[0].mxu0
      %v998 = vpop.f32.mrb[0].mxu0
      %v999 = vadd.f32 %v799, %v998
      %v1000 = vpop.f32.mrb[0].mxu0
      %1001 = vmatprep.mubr.bf16.mxu0 0
      %1002 = vmatmul.mubr.bf16.gmra.mrb[0].mxu0 %v759
      %v1003 = vpop.f32.mrb[0].mxu0
      %v1004 = vadd.f32 %v799, %v1003
      %v1005 = vpop.f32.mrb[0].mxu0
      %v1006 = vpop.f32.mrb[0].mxu0
      %v1007 = vadd.f32 %v799, %v1006
      %v1008 = vpop.f32.mrb[0].mxu0
      %1009 = vmatprep.mubr.bf16.mxu0 0
      %1010 = vmatmul.mubr.bf16.gmra.mrb[0].mxu0 %v760
      %v1011 = vpop.f32.mrb[0].mxu0
      %v1012 = vadd.f32 %v799, %v1011
      %v1013 = vpop.f32.mrb[0].mxu0
      %v1014 = vpop.f32.mrb[0].mxu0
      %v1015 = vadd.f32 %v799, %v1014
      %v1016 = vpop.f32.mrb[0].mxu0
      %1017 = vmatprep.mubr.bf16.mxu0 0
      %1018 = vmatmul.mubr.bf16.gmra.mrb[0].mxu0 %v761
      %v1019 = vpop.f32.mrb[0].mxu0
      %v1020 = vadd.f32 %v799, %v1019
      %v1021 = vpop.f32.mrb[0].mxu0
      %v1022 = vpop.f32.mrb[0].mxu0
      %v1023 = vadd.f32 %v799, %v1022
      %v1024 = vpop.f32.mrb[0].mxu0
      %1025 = vmatprep.mubr.bf16.mxu0 0
      %1026 = vmatmul.mubr.bf16.gmra.mrb[0].mxu0 %v762
      %v1027 = vpop.f32.mrb[0].mxu0
      %v1028 = vadd.f32 %v799, %v1027
      %v1029 = vpop.f32.mrb[0].mxu0
      %v1030 = vpop.f32.mrb[0].mxu0
      %v1031 = vadd.f32 %v799, %v1030
      %v1032 = vpop.f32.mrb[0].mxu0
      %1033 = vmatprep.mubr.bf16.mxu0 0
      %1034 = vmatmul.mubr.bf16.gmra.mrb[0].mxu0 %v763
      %v1035 = vpop.f32.mrb[0].mxu0
      %v1036 = vadd.f32 %v799, %v1035
      %v1037 = vpop.f32.mrb[0].mxu0
      %v1038 = vpop.f32.mrb[0].mxu0
      %v1039 = vadd.f32 %v799, %v1038
      %v1040 = vpop.f32.mrb[0].mxu0
      %1041 = vmatprep.mubr.bf16.mxu0 0
      %1042 = vmatmul.mubr.bf16.gmra.mrb[0].mxu0 %v764
      %v1043 = vpop.f32.mrb[0].mxu0
      %v1044 = vadd.f32 %v799, %v1043
      %v1045 = vpop.f32.mrb[0].mxu0
      %v1046 = vpop.f32.mrb[0].mxu0
      %v1047 = vadd.f32 %v799, %v1046
      %v1048 = vpop.f32.mrb[0].mxu0
      %1049 = vmatprep.mubr.bf16.mxu0 0
      %1050 = vmatmul.mubr.bf16.gmra.mrb[0].mxu0 %v765
      %v1051 = vpop.f32.mrb[0].mxu0
      %v1052 = vadd.f32 %v799, %v1051
      %v1053 = vpop.f32.mrb[0].mxu0
      %v1054 = vpop.f32.mrb[0].mxu0
      %v1055 = vadd.f32 %v799, %v1054
      %v1056 = vpop.f32.mrb[0].mxu0
      %1057 = vmatprep.mubr.bf16.mxu0 0
      %1058 = vmatmul.mubr.bf16.gmra.mrb[0].mxu0 %v766
      %v1059 = vpop.f32.mrb[0].mxu0
      %v1060 = vadd.f32 %v799, %v1059
      %v1061 = vpop.f32.mrb[0].mxu0
      %v1062 = vpop.f32.mrb[0].mxu0
      %v1063 = vadd.f32 %v799, %v1062
      %v1064 = vpop.f32.mrb[0].mxu0
      %1065 = vmatprep.mubr.bf16.mxu0 0
      %1066 = vmatmul.mubr.bf16.gmra.mrb[0].mxu0 %v767
      %v1067 = vpop.f32.mrb[0].mxu0
      %v1068 = vadd.f32 %v799, %v1067
      %v1069 = vpop.f32.mrb[0].mxu0
      %v1070 = vpop.f32.mrb[0].mxu0
      %v1071 = vadd.f32 %v799, %v1070
      %v1072 = vpop.f32.mrb[0].mxu0
      %1073 = vmatprep.mubr.bf16.mxu0 0
      %1074 = vmatmul.mubr.bf16.gmra.mrb[0].mxu0 %v768
      %v1075 = vpop.f32.mrb[0].mxu0
      %v1076 = vadd.f32 %v799, %v1075
      %v1077 = vpop.f32.mrb[0].mxu0
      %v1078 = vpop.f32.mrb[0].mxu0
      %v1079 = vadd.f32 %v799, %v1078
      %v1080 = vpop.f32.mrb[0].mxu0
      %1081 = vmatprep.mubr.bf16.mxu0 0
      %1082 = vmatmul.mubr.bf16.gmra.mrb[0].mxu0 %v769
      %v1083 = vpop.f32.mrb[0].mxu0
      %v1084 = vadd.f32 %v799, %v1083
      %v1085 = vpop.f32.mrb[0].mxu0
      %v1086 = vpop.f32.mrb[0].mxu0
      %v1087 = vadd.f32 %v799, %v1086
      %v1088 = vpop.f32.mrb[0].mxu0
      %1089 = vmatprep.mubr.bf16.mxu0 0
      %1090 = vmatmul.mubr.bf16.gmra.mrb[0].mxu0 %v770
      %v1091 = vpop.f32.mrb[0].mxu0
      %v1092 = vadd.f32 %v799, %v1091
      %v1093 = vpop.f32.mrb[0].mxu0
      %v1094 = vpop.f32.mrb[0].mxu0
      %v1095 = vadd.f32 %v799, %v1094
      %v1096 = vpop.f32.mrb[0].mxu0
      %1097 = vmatprep.mubr.bf16.mxu0 0
      %1098 = vmatmul.mubr.bf16.gmra.mrb[0].mxu0 %v771
      %v1099 = vpop.f32.mrb[0].mxu0
      %v1100 = vadd.f32 %v799, %v1099
      %v1101 = vpop.f32.mrb[0].mxu0
      %v1102 = vpop.f32.mrb[0].mxu0
      %v1103 = vadd.f32 %v799, %v1102
      %v1104 = vpop.f32.mrb[0].mxu0
      %1105 = vmatprep.mubr.bf16.mxu0 0
      %1106 = vmatmul.mubr.bf16.gmra.mrb[0].mxu0 %v772
      %v1107 = vpop.f32.mrb[0].mxu0
      %v1108 = vadd.f32 %v799, %v1107
      %v1109 = vpop.f32.mrb[0].mxu0
      %v1110 = vpop.f32.mrb[0].mxu0
      %v1111 = vadd.f32 %v799, %v1110
      %v1112 = vpop.f32.mrb[0].mxu0
      %1113 = vmatprep.mubr.bf16.mxu0 0
      %1114 = vmatmul.mubr.bf16.gmra.mrb[0].mxu0 %v773
      %v1115 = vpop.f32.mrb[0].mxu0
      %v1116 = vadd.f32 %v799, %v1115
      %v1117 = vpop.f32.mrb[0].mxu0
      %v1118 = vpop.f32.mrb[0].mxu0
      %v1119 = vadd.f32 %v799, %v1118
      %v1120 = vpop.f32.mrb[0].mxu0
      %1121 = vmatprep.mubr.bf16.mxu0 0
      %1122 = vmatmul.mubr.bf16.gmra.mrb[0].mxu0 %v774
      %v1123 = vpop.f32.mrb[0].mxu0
      %v1124 = vadd.f32 %v799, %v1123
      %v1125 = vpop.f32.mrb[0].mxu0
      %v1126 = vpop.f32.mrb[0].mxu0
      %v1127 = vadd.f32 %v799, %v1126
      %v1128 = vpop.f32.mrb[0].mxu0
      %1129 = vmatprep.mubr.bf16.mxu0 0
      %1130 = vmatmul.mubr.bf16.gmra.mrb[0].mxu0 %v775
      %v1131 = vpop.f32.mrb[0].mxu0
      %v1132 = vadd.f32 %v799, %v1131
      %v1133 = vpop.f32.mrb[0].mxu0
      %v1134 = vpop.f32.mrb[0].mxu0
      %v1135 = vadd.f32 %v799, %v1134
      %v1136 = vpop.f32.mrb[0].mxu0
      %1137 = vdwg.mxu0
      %v1138 = vmax.f32 %v884, 0.0
      %v1139 = vmax.f32 %v887, 0.0
      %v1140 = vmax.f32 %v892, 0.0
      %v1141 = vmax.f32 %v895, 0.0
      %v1142 = vmax.f32 %v900, 0.0
      %v1143 = vmax.f32 %v903, 0.0
      %v1144 = vmax.f32 %v908, 0.0
      %v1145 = vmax.f32 %v911, 0.0
      %v1146 = vmax.f32 %v916, 0.0
      %v1147 = vmax.f32 %v919, 0.0
      %v1148 = vmax.f32 %v924, 0.0
      %v1149 = vmax.f32 %v927, 0.0
      %v1150 = vmax.f32 %v932, 0.0
      %v1151 = vmax.f32 %v935, 0.0
      %v1152 = vmax.f32 %v940, 0.0
      %v1153 = vmax.f32 %v943, 0.0
      %v1154 = vmax.f32 %v948, 0.0
      %v1155 = vmax.f32 %v951, 0.0
      %v1156 = vmax.f32 %v956, 0.0
      %v1157 = vmax.f32 %v959, 0.0
      %v1158 = vmax.f32 %v964, 0.0
      %v1159 = vmax.f32 %v967, 0.0
      %v1160 = vmax.f32 %v972, 0.0
      %v1161 = vmax.f32 %v975, 0.0
      %v1162 = vmax.f32 %v980, 0.0
      %v1163 = vmax.f32 %v983, 0.0
      %v1164 = vmax.f32 %v988, 0.0
      %v1165 = vmax.f32 %v991, 0.0
      %v1166 = vmax.f32 %v996, 0.0
      %v1167 = vmax.f32 %v999, 0.0
      %v1168 = vmax.f32 %v1004, 0.0
      %v1169 = vmax.f32 %v1007, 0.0
      %v1170 = vmax.f32 %v1012, 0.0
      %v1171 = vmax.f32 %v1015, 0.0
      %v1172 = vmax.f32 %v1020, 0.0
      %v1173 = vmax.f32 %v1023, 0.0
      %v1174 = vmax.f32 %v1028, 0.0
      %v1175 = vmax.f32 %v1031, 0.0
      %v1176 = vmax.f32 %v1036, 0.0
      %v1177 = vmax.f32 %v1039, 0.0
      %v1178 = vmax.f32 %v1044, 0.0
      %v1179 = vmax.f32 %v1047, 0.0
      %v1180 = vmax.f32 %v1052, 0.0
      %v1181 = vmax.f32 %v1055, 0.0
      %v1182 = vmax.f32 %v1060, 0.0
      %v1183 = vmax.f32 %v1063, 0.0
      %v1184 = vmax.f32 %v1068, 0.0
      %v1185 = vmax.f32 %v1071, 0.0
      %v1186 = vmax.f32 %v1076, 0.0
      %v1187 = vmax.f32 %v1079, 0.0
      %v1188 = vmax.f32 %v1084, 0.0
      %v1189 = vmax.f32 %v1087, 0.0
      %v1190 = vmax.f32 %v1092, 0.0
      %v1191 = vmax.f32 %v1095, 0.0
      %v1192 = vmax.f32 %v1100, 0.0
      %v1193 = vmax.f32 %v1103, 0.0
      %v1194 = vmax.f32 %v1108, 0.0
      %v1195 = vmax.f32 %v1111, 0.0
      %v1196 = vmax.f32 %v1116, 0.0
      %v1197 = vmax.f32 %v1119, 0.0
      %v1198 = vmax.f32 %v1124, 0.0
      %v1199 = vmax.f32 %v1127, 0.0
      %v1200 = vmax.f32 %v1132, 0.0
      %v1201 = vmax.f32 %v1135, 0.0
      %v1202 = vpack.c.bf16 %v1139, %v1138
      %v1203 = vpack.c.bf16 %v1141, %v1140
      %v1204 = vpack.c.bf16 %v1143, %v1142
      %v1205 = vpack.c.bf16 %v1145, %v1144
      %v1206 = vpack.c.bf16 %v1147, %v1146
      %v1207 = vpack.c.bf16 %v1149, %v1148
      %v1208 = vpack.c.bf16 %v1151, %v1150
      %v1209 = vpack.c.bf16 %v1153, %v1152
      %v1210 = vpack.c.bf16 %v1155, %v1154
      %v1211 = vpack.c.bf16 %v1157, %v1156
      %v1212 = vpack.c.bf16 %v1159, %v1158
      %v1213 = vpack.c.bf16 %v1161, %v1160
      %v1214 = vpack.c.bf16 %v1163, %v1162
      %v1215 = vpack.c.bf16 %v1165, %v1164
      %v1216 = vpack.c.bf16 %v1167, %v1166
      %v1217 = vpack.c.bf16 %v1169, %v1168
      %v1218 = vpack.c.bf16 %v1171, %v1170
      %v1219 = vpack.c.bf16 %v1173, %v1172
      %v1220 = vpack.c.bf16 %v1175, %v1174
      %v1221 = vpack.c.bf16 %v1177, %v1176
      %v1222 = vpack.c.bf16 %v1179, %v1178
      %v1223 = vpack.c.bf16 %v1181, %v1180
      %v1224 = vpack.c.bf16 %v1183, %v1182
      %v1225 = vpack.c.bf16 %v1185, %v1184
      %v1226 = vpack.c.bf16 %v1187, %v1186
      %v1227 = vpack.c.bf16 %v1189, %v1188
      %v1228 = vpack.c.bf16 %v1191, %v1190
      %v1229 = vpack.c.bf16 %v1193, %v1192
      %v1230 = vpack.c.bf16 %v1195, %v1194
      %v1231 = vpack.c.bf16 %v1197, %v1196
      %v1232 = vpack.c.bf16 %v1199, %v1198
      %v1233 = vpack.c.bf16 %v1201, %v1200
      %s1234 = scalar_lea.vmem %s1, 128
      %v1235 = vld [vmem:[%s1234] sm:$0xf]
      %v1236 = vld [vmem:[%s1234 + $0x4] sm:$0xf]
      %v1237 = vld [vmem:[%s1234 + $0x8] sm:$0xf]
      %v1238 = vld [vmem:[%s1234 + $0xc] sm:$0xf]
      %v1239 = vld [vmem:[%s1234 + $0x10] sm:$0xf]
      %v1240 = vld [vmem:[%s1234 + $0x14] sm:$0xf]
      %v1241 = vld [vmem:[%s1234 + $0x18] sm:$0xf]
      %v1242 = vld [vmem:[%s1234 + $0x1c] sm:$0xf]
      %v1243 = vld [vmem:[%s1234 + $0x20] sm:$0xf]
      %v1244 = vld [vmem:[%s1234 + $0x24] sm:$0xf]
      %v1245 = vld [vmem:[%s1234 + $0x28] sm:$0xf]
      %v1246 = vld [vmem:[%s1234 + $0x2c] sm:$0xf]
      %v1247 = vld [vmem:[%s1234 + $0x30] sm:$0xf]
      %v1248 = vld [vmem:[%s1234 + $0x34] sm:$0xf]
      %v1249 = vld [vmem:[%s1234 + $0x38] sm:$0xf]
      %v1250 = vld [vmem:[%s1234 + $0x3c] sm:$0xf]
      %s1251 = scalar_lea.vmem %s2, 2
      %v1252 = vld [vmem:[%s1251] sm:$0x1]
      %v1254 = vlaneseq
      %v1255 = vshrl.u32 %v1254, 7
      %v1256 = vsub.s32 0, %v1255
      %v1257 = vrot.slane %v1252, %v1256
      %v1275 = vunpack.c.l.b16 %v1235
      %v1276 = vunpack.c.l.b16 %v1236
      %v1277 = vunpack.c.l.b16 %v1237
      %v1278 = vunpack.c.l.b16 %v1238
      %v1279 = vunpack.c.l.b16 %v1239
      %v1280 = vunpack.c.l.b16 %v1240
      %v1281 = vunpack.c.l.b16 %v1241
      %v1282 = vunpack.c.l.b16 %v1242
      %v1283 = vunpack.c.l.b16 %v1243
      %v1284 = vunpack.c.l.b16 %v1244
      %v1285 = vunpack.c.l.b16 %v1245
      %v1286 = vunpack.c.l.b16 %v1246
      %v1287 = vunpack.c.l.b16 %v1247
      %v1288 = vunpack.c.l.b16 %v1248
      %v1289 = vunpack.c.l.b16 %v1249
      %v1290 = vunpack.c.l.b16 %v1250
      %v1291 = vpack.c.b16 %v1276, %v1275
      %v1292 = vpack.c.b16 %v1278, %v1277
      %v1293 = vpack.c.b16 %v1280, %v1279
      %v1294 = vpack.c.b16 %v1282, %v1281
      %v1295 = vpack.c.b16 %v1284, %v1283
      %v1296 = vpack.c.b16 %v1286, %v1285
      %v1297 = vpack.c.b16 %v1288, %v1287
      %v1298 = vpack.c.b16 %v1290, %v1289
      %1307 = vmatprep.subr.bf16.mxu0 0
      %1308 = vmatpush1.bf16.msra.mxu0 %v1291
      %1309 = vmatprep.subr.bf16.mxu0 0
      %1310 = vmatpush1.bf16.msra.mxu0 %v1292
      %1311 = vmatprep.subr.bf16.mxu0 0
      %1312 = vmatpush1.bf16.msra.mxu0 %v1293
      %1313 = vmatprep.subr.bf16.mxu0 0
      %1314 = vmatpush1.bf16.msra.mxu0 %v1294
      %1315 = vmatprep.subr.bf16.mxu0 0
      %1316 = vmatpush1.bf16.msra.mxu0 %v1295
      %1317 = vmatprep.subr.bf16.mxu0 0
      %1318 = vmatpush1.bf16.msra.mxu0 %v1296
      %1319 = vmatprep.subr.bf16.mxu0 0
      %1320 = vmatpush1.bf16.msra.mxu0 %v1297
      %1321 = vmatprep.subr.bf16.mxu0 0
      %1322 = vmatpush1.bf16.msra.mxu0 %v1298
      %1323 = vmatprep.subr.bf16.mxu0 0
      %1324 = vmatpush1.bf16.msra.mxu0 0
      %1325 = vmatprep.subr.bf16.mxu0 0
      %1326 = vmatpush1.bf16.msra.mxu0 0
      %1327 = vmatprep.subr.bf16.mxu0 0
      %1328 = vmatpush1.bf16.msra.mxu0 0
      %1329 = vmatprep.subr.bf16.mxu0 0
      %1330 = vmatpush1.bf16.msra.mxu0 0
      %1331 = vmatprep.subr.bf16.mxu0 0
      %1332 = vmatpush1.bf16.msra.mxu0 0
      %1333 = vmatprep.subr.bf16.mxu0 0
      %1334 = vmatpush1.bf16.msra.mxu0 0
      %1335 = vmatprep.subr.bf16.mxu0 0
      %1336 = vmatpush1.bf16.msra.mxu0 0
      %1337 = vmatprep.subr.bf16.mxu0 0
      %1338 = vmatpush1.bf16.msra.mxu0 0
      %1339 = vmatprep.mubr.bf16.mxu0 0
      %1340 = vmatmul.mubr.bf16.gmra.mrb[0].mxu0 %v1202
      %v1341 = vpop.f32.mrb[0].mxu0
      %v1342 = vadd.f32 %v1257, %v1341
      %v1343 = vpop.f32.mrb[0].mxu0
      %v1344 = vpop.f32.mrb[0].mxu0
      %v1345 = vadd.f32 %v1257, %v1344
      %v1346 = vpop.f32.mrb[0].mxu0
      %1347 = vmatprep.mubr.bf16.mxu0 0
      %1348 = vmatmul.mubr.bf16.gmra.mrb[0].mxu0 %v1203
      %v1349 = vpop.f32.mrb[0].mxu0
      %v1350 = vadd.f32 %v1257, %v1349
      %v1351 = vpop.f32.mrb[0].mxu0
      %v1352 = vpop.f32.mrb[0].mxu0
      %v1353 = vadd.f32 %v1257, %v1352
      %v1354 = vpop.f32.mrb[0].mxu0
      %1355 = vmatprep.mubr.bf16.mxu0 0
      %1356 = vmatmul.mubr.bf16.gmra.mrb[0].mxu0 %v1204
      %v1357 = vpop.f32.mrb[0].mxu0
      %v1358 = vadd.f32 %v1257, %v1357
      %v1359 = vpop.f32.mrb[0].mxu0
      %v1360 = vpop.f32.mrb[0].mxu0
      %v1361 = vadd.f32 %v1257, %v1360
      %v1362 = vpop.f32.mrb[0].mxu0
      %1363 = vmatprep.mubr.bf16.mxu0 0
      %1364 = vmatmul.mubr.bf16.gmra.mrb[0].mxu0 %v1205
      %v1365 = vpop.f32.mrb[0].mxu0
      %v1366 = vadd.f32 %v1257, %v1365
      %v1367 = vpop.f32.mrb[0].mxu0
      %v1368 = vpop.f32.mrb[0].mxu0
      %v1369 = vadd.f32 %v1257, %v1368
      %v1370 = vpop.f32.mrb[0].mxu0
      %1371 = vmatprep.mubr.bf16.mxu0 0
      %1372 = vmatmul.mubr.bf16.gmra.mrb[0].mxu0 %v1206
      %v1373 = vpop.f32.mrb[0].mxu0
      %v1374 = vadd.f32 %v1257, %v1373
      %v1375 = vpop.f32.mrb[0].mxu0
      %v1376 = vpop.f32.mrb[0].mxu0
      %v1377 = vadd.f32 %v1257, %v1376
      %v1378 = vpop.f32.mrb[0].mxu0
      %1379 = vmatprep.mubr.bf16.mxu0 0
      %1380 = vmatmul.mubr.bf16.gmra.mrb[0].mxu0 %v1207
      %v1381 = vpop.f32.mrb[0].mxu0
      %v1382 = vadd.f32 %v1257, %v1381
      %v1383 = vpop.f32.mrb[0].mxu0
      %v1384 = vpop.f32.mrb[0].mxu0
      %v1385 = vadd.f32 %v1257, %v1384
      %v1386 = vpop.f32.mrb[0].mxu0
      %1387 = vmatprep.mubr.bf16.mxu0 0
      %1388 = vmatmul.mubr.bf16.gmra.mrb[0].mxu0 %v1208
      %v1389 = vpop.f32.mrb[0].mxu0
      %v1390 = vadd.f32 %v1257, %v1389
      %v1391 = vpop.f32.mrb[0].mxu0
      %v1392 = vpop.f32.mrb[0].mxu0
      %v1393 = vadd.f32 %v1257, %v1392
      %v1394 = vpop.f32.mrb[0].mxu0
      %1395 = vmatprep.mubr.bf16.mxu0 0
      %1396 = vmatmul.mubr.bf16.gmra.mrb[0].mxu0 %v1209
      %v1397 = vpop.f32.mrb[0].mxu0
      %v1398 = vadd.f32 %v1257, %v1397
      %v1399 = vpop.f32.mrb[0].mxu0
      %v1400 = vpop.f32.mrb[0].mxu0
      %v1401 = vadd.f32 %v1257, %v1400
      %v1402 = vpop.f32.mrb[0].mxu0
      %1403 = vmatprep.mubr.bf16.mxu0 0
      %1404 = vmatmul.mubr.bf16.gmra.mrb[0].mxu0 %v1210
      %v1405 = vpop.f32.mrb[0].mxu0
      %v1406 = vadd.f32 %v1257, %v1405
      %v1407 = vpop.f32.mrb[0].mxu0
      %v1408 = vpop.f32.mrb[0].mxu0
      %v1409 = vadd.f32 %v1257, %v1408
      %v1410 = vpop.f32.mrb[0].mxu0
      %1411 = vmatprep.mubr.bf16.mxu0 0
      %1412 = vmatmul.mubr.bf16.gmra.mrb[0].mxu0 %v1211
      %v1413 = vpop.f32.mrb[0].mxu0
      %v1414 = vadd.f32 %v1257, %v1413
      %v1415 = vpop.f32.mrb[0].mxu0
      %v1416 = vpop.f32.mrb[0].mxu0
      %v1417 = vadd.f32 %v1257, %v1416
      %v1418 = vpop.f32.mrb[0].mxu0
      %1419 = vmatprep.mubr.bf16.mxu0 0
      %1420 = vmatmul.mubr.bf16.gmra.mrb[0].mxu0 %v1212
      %v1421 = vpop.f32.mrb[0].mxu0
      %v1422 = vadd.f32 %v1257, %v1421
      %v1423 = vpop.f32.mrb[0].mxu0
      %v1424 = vpop.f32.mrb[0].mxu0
      %v1425 = vadd.f32 %v1257, %v1424
      %v1426 = vpop.f32.mrb[0].mxu0
      %1427 = vmatprep.mubr.bf16.mxu0 0
      %1428 = vmatmul.mubr.bf16.gmra.mrb[0].mxu0 %v1213
      %v1429 = vpop.f32.mrb[0].mxu0
      %v1430 = vadd.f32 %v1257, %v1429
      %v1431 = vpop.f32.mrb[0].mxu0
      %v1432 = vpop.f32.mrb[0].mxu0
      %v1433 = vadd.f32 %v1257, %v1432
      %v1434 = vpop.f32.mrb[0].mxu0
      %1435 = vmatprep.mubr.bf16.mxu0 0
      %1436 = vmatmul.mubr.bf16.gmra.mrb[0].mxu0 %v1214
      %v1437 = vpop.f32.mrb[0].mxu0
      %v1438 = vadd.f32 %v1257, %v1437
      %v1439 = vpop.f32.mrb[0].mxu0
      %v1440 = vpop.f32.mrb[0].mxu0
      %v1441 = vadd.f32 %v1257, %v1440
      %v1442 = vpop.f32.mrb[0].mxu0
      %1443 = vmatprep.mubr.bf16.mxu0 0
      %1444 = vmatmul.mubr.bf16.gmra.mrb[0].mxu0 %v1215
      %v1445 = vpop.f32.mrb[0].mxu0
      %v1446 = vadd.f32 %v1257, %v1445
      %v1447 = vpop.f32.mrb[0].mxu0
      %v1448 = vpop.f32.mrb[0].mxu0
      %v1449 = vadd.f32 %v1257, %v1448
      %v1450 = vpop.f32.mrb[0].mxu0
      %1451 = vmatprep.mubr.bf16.mxu0 0
      %1452 = vmatmul.mubr.bf16.gmra.mrb[0].mxu0 %v1216
      %v1453 = vpop.f32.mrb[0].mxu0
      %v1454 = vadd.f32 %v1257, %v1453
      %v1455 = vpop.f32.mrb[0].mxu0
      %v1456 = vpop.f32.mrb[0].mxu0
      %v1457 = vadd.f32 %v1257, %v1456
      %v1458 = vpop.f32.mrb[0].mxu0
      %1459 = vmatprep.mubr.bf16.mxu0 0
      %1460 = vmatmul.mubr.bf16.gmra.mrb[0].mxu0 %v1217
      %v1461 = vpop.f32.mrb[0].mxu0
      %v1462 = vadd.f32 %v1257, %v1461
      %v1463 = vpop.f32.mrb[0].mxu0
      %v1464 = vpop.f32.mrb[0].mxu0
      %v1465 = vadd.f32 %v1257, %v1464
      %v1466 = vpop.f32.mrb[0].mxu0
      %1467 = vmatprep.mubr.bf16.mxu0 0
      %1468 = vmatmul.mubr.bf16.gmra.mrb[0].mxu0 %v1218
      %v1469 = vpop.f32.mrb[0].mxu0
      %v1470 = vadd.f32 %v1257, %v1469
      %v1471 = vpop.f32.mrb[0].mxu0
      %v1472 = vpop.f32.mrb[0].mxu0
      %v1473 = vadd.f32 %v1257, %v1472
      %v1474 = vpop.f32.mrb[0].mxu0
      %1475 = vmatprep.mubr.bf16.mxu0 0
      %1476 = vmatmul.mubr.bf16.gmra.mrb[0].mxu0 %v1219
      %v1477 = vpop.f32.mrb[0].mxu0
      %v1478 = vadd.f32 %v1257, %v1477
      %v1479 = vpop.f32.mrb[0].mxu0
      %v1480 = vpop.f32.mrb[0].mxu0
      %v1481 = vadd.f32 %v1257, %v1480
      %v1482 = vpop.f32.mrb[0].mxu0
      %1483 = vmatprep.mubr.bf16.mxu0 0
      %1484 = vmatmul.mubr.bf16.gmra.mrb[0].mxu0 %v1220
      %v1485 = vpop.f32.mrb[0].mxu0
      %v1486 = vadd.f32 %v1257, %v1485
      %v1487 = vpop.f32.mrb[0].mxu0
      %v1488 = vpop.f32.mrb[0].mxu0
      %v1489 = vadd.f32 %v1257, %v1488
      %v1490 = vpop.f32.mrb[0].mxu0
      %1491 = vmatprep.mubr.bf16.mxu0 0
      %1492 = vmatmul.mubr.bf16.gmra.mrb[0].mxu0 %v1221
      %v1493 = vpop.f32.mrb[0].mxu0
      %v1494 = vadd.f32 %v1257, %v1493
      %v1495 = vpop.f32.mrb[0].mxu0
      %v1496 = vpop.f32.mrb[0].mxu0
      %v1497 = vadd.f32 %v1257, %v1496
      %v1498 = vpop.f32.mrb[0].mxu0
      %1499 = vmatprep.mubr.bf16.mxu0 0
      %1500 = vmatmul.mubr.bf16.gmra.mrb[0].mxu0 %v1222
      %v1501 = vpop.f32.mrb[0].mxu0
      %v1502 = vadd.f32 %v1257, %v1501
      %v1503 = vpop.f32.mrb[0].mxu0
      %v1504 = vpop.f32.mrb[0].mxu0
      %v1505 = vadd.f32 %v1257, %v1504
      %v1506 = vpop.f32.mrb[0].mxu0
      %1507 = vmatprep.mubr.bf16.mxu0 0
      %1508 = vmatmul.mubr.bf16.gmra.mrb[0].mxu0 %v1223
      %v1509 = vpop.f32.mrb[0].mxu0
      %v1510 = vadd.f32 %v1257, %v1509
      %v1511 = vpop.f32.mrb[0].mxu0
      %v1512 = vpop.f32.mrb[0].mxu0
      %v1513 = vadd.f32 %v1257, %v1512
      %v1514 = vpop.f32.mrb[0].mxu0
      %1515 = vmatprep.mubr.bf16.mxu0 0
      %1516 = vmatmul.mubr.bf16.gmra.mrb[0].mxu0 %v1224
      %v1517 = vpop.f32.mrb[0].mxu0
      %v1518 = vadd.f32 %v1257, %v1517
      %v1519 = vpop.f32.mrb[0].mxu0
      %v1520 = vpop.f32.mrb[0].mxu0
      %v1521 = vadd.f32 %v1257, %v1520
      %v1522 = vpop.f32.mrb[0].mxu0
      %1523 = vmatprep.mubr.bf16.mxu0 0
      %1524 = vmatmul.mubr.bf16.gmra.mrb[0].mxu0 %v1225
      %v1525 = vpop.f32.mrb[0].mxu0
      %v1526 = vadd.f32 %v1257, %v1525
      %v1527 = vpop.f32.mrb[0].mxu0
      %v1528 = vpop.f32.mrb[0].mxu0
      %v1529 = vadd.f32 %v1257, %v1528
      %v1530 = vpop.f32.mrb[0].mxu0
      %1531 = vmatprep.mubr.bf16.mxu0 0
      %1532 = vmatmul.mubr.bf16.gmra.mrb[0].mxu0 %v1226
      %v1533 = vpop.f32.mrb[0].mxu0
      %v1534 = vadd.f32 %v1257, %v1533
      %v1535 = vpop.f32.mrb[0].mxu0
      %v1536 = vpop.f32.mrb[0].mxu0
      %v1537 = vadd.f32 %v1257, %v1536
      %v1538 = vpop.f32.mrb[0].mxu0
      %1539 = vmatprep.mubr.bf16.mxu0 0
      %1540 = vmatmul.mubr.bf16.gmra.mrb[0].mxu0 %v1227
      %v1541 = vpop.f32.mrb[0].mxu0
      %v1542 = vadd.f32 %v1257, %v1541
      %v1543 = vpop.f32.mrb[0].mxu0
      %v1544 = vpop.f32.mrb[0].mxu0
      %v1545 = vadd.f32 %v1257, %v1544
      %v1546 = vpop.f32.mrb[0].mxu0
      %1547 = vmatprep.mubr.bf16.mxu0 0
      %1548 = vmatmul.mubr.bf16.gmra.mrb[0].mxu0 %v1228
      %v1549 = vpop.f32.mrb[0].mxu0
      %v1550 = vadd.f32 %v1257, %v1549
      %v1551 = vpop.f32.mrb[0].mxu0
      %v1552 = vpop.f32.mrb[0].mxu0
      %v1553 = vadd.f32 %v1257, %v1552
      %v1554 = vpop.f32.mrb[0].mxu0
      %1555 = vmatprep.mubr.bf16.mxu0 0
      %1556 = vmatmul.mubr.bf16.gmra.mrb[0].mxu0 %v1229
      %v1557 = vpop.f32.mrb[0].mxu0
      %v1558 = vadd.f32 %v1257, %v1557
      %v1559 = vpop.f32.mrb[0].mxu0
      %v1560 = vpop.f32.mrb[0].mxu0
      %v1561 = vadd.f32 %v1257, %v1560
      %v1562 = vpop.f32.mrb[0].mxu0
      %1563 = vmatprep.mubr.bf16.mxu0 0
      %1564 = vmatmul.mubr.bf16.gmra.mrb[0].mxu0 %v1230
      %v1565 = vpop.f32.mrb[0].mxu0
      %v1566 = vadd.f32 %v1257, %v1565
      %v1567 = vpop.f32.mrb[0].mxu0
      %v1568 = vpop.f32.mrb[0].mxu0
      %v1569 = vadd.f32 %v1257, %v1568
      %v1570 = vpop.f32.mrb[0].mxu0
      %1571 = vmatprep.mubr.bf16.mxu0 0
      %1572 = vmatmul.mubr.bf16.gmra.mrb[0].mxu0 %v1231
      %v1573 = vpop.f32.mrb[0].mxu0
      %v1574 = vadd.f32 %v1257, %v1573
      %v1575 = vpop.f32.mrb[0].mxu0
      %v1576 = vpop.f32.mrb[0].mxu0
      %v1577 = vadd.f32 %v1257, %v1576
      %v1578 = vpop.f32.mrb[0].mxu0
      %1579 = vmatprep.mubr.bf16.mxu0 0
      %1580 = vmatmul.mubr.bf16.gmra.mrb[0].mxu0 %v1232
      %v1581 = vpop.f32.mrb[0].mxu0
      %v1582 = vadd.f32 %v1257, %v1581
      %v1583 = vpop.f32.mrb[0].mxu0
      %v1584 = vpop.f32.mrb[0].mxu0
      %v1585 = vadd.f32 %v1257, %v1584
      %v1586 = vpop.f32.mrb[0].mxu0
      %1587 = vmatprep.mubr.bf16.mxu0 0
      %1588 = vmatmul.mubr.bf16.gmra.mrb[0].mxu0 %v1233
      %v1589 = vpop.f32.mrb[0].mxu0
      %v1590 = vadd.f32 %v1257, %v1589
      %v1591 = vpop.f32.mrb[0].mxu0
      %v1592 = vpop.f32.mrb[0].mxu0
      %v1593 = vadd.f32 %v1257, %v1592
      %v1594 = vpop.f32.mrb[0].mxu0
      %1595 = vdwg.mxu0
      %vm1596 = vcmask 31744
      %1597 = vst.msk [vmem:[%s172] sm:$0xff] %vm1596, %v1342
      %1598 = vst.msk [vmem:[%s172 + $0x8] sm:$0xff] %vm1596, %v1345
      %1599 = vst.msk [vmem:[%s172 + $0x10] sm:$0xff] %vm1596, %v1350
      %1600 = vst.msk [vmem:[%s172 + $0x18] sm:$0xff] %vm1596, %v1353
      %1601 = vst.msk [vmem:[%s172 + $0x20] sm:$0xff] %vm1596, %v1358
      %1602 = vst.msk [vmem:[%s172 + $0x28] sm:$0xff] %vm1596, %v1361
      %1603 = vst.msk [vmem:[%s172 + $0x30] sm:$0xff] %vm1596, %v1366
      %1604 = vst.msk [vmem:[%s172 + $0x38] sm:$0xff] %vm1596, %v1369
      %1605 = vst.msk [vmem:[%s172 + $0x40] sm:$0xff] %vm1596, %v1374
      %1606 = vst.msk [vmem:[%s172 + $0x48] sm:$0xff] %vm1596, %v1377
      %1607 = vst.msk [vmem:[%s172 + $0x50] sm:$0xff] %vm1596, %v1382
      %1608 = vst.msk [vmem:[%s172 + $0x58] sm:$0xff] %vm1596, %v1385
      %1609 = vst.msk [vmem:[%s172 + $0x60] sm:$0xff] %vm1596, %v1390
      %1610 = vst.msk [vmem:[%s172 + $0x68] sm:$0xff] %vm1596, %v1393
      %1611 = vst.msk [vmem:[%s172 + $0x70] sm:$0xff] %vm1596, %v1398
      %1612 = vst.msk [vmem:[%s172 + $0x78] sm:$0xff] %vm1596, %v1401
      %1613 = vst.msk [vmem:[%s172 + $0x80] sm:$0xff] %vm1596, %v1406
      %1614 = vst.msk [vmem:[%s172 + $0x88] sm:$0xff] %vm1596, %v1409
      %1615 = vst.msk [vmem:[%s172 + $0x90] sm:$0xff] %vm1596, %v1414
      %1616 = vst.msk [vmem:[%s172 + $0x98] sm:$0xff] %vm1596, %v1417
      %1617 = vst.msk [vmem:[%s172 + $0xa0] sm:$0xff] %vm1596, %v1422
      %1618 = vst.msk [vmem:[%s172 + $0xa8] sm:$0xff] %vm1596, %v1425
      %1619 = vst.msk [vmem:[%s172 + $0xb0] sm:$0xff] %vm1596, %v1430
      %1620 = vst.msk [vmem:[%s172 + $0xb8] sm:$0xff] %vm1596, %v1433
      %1621 = vst.msk [vmem:[%s172 + $0xc0] sm:$0xff] %vm1596, %v1438
      %1622 = vst.msk [vmem:[%s172 + $0xc8] sm:$0xff] %vm1596, %v1441
      %1623 = vst.msk [vmem:[%s172 + $0xd0] sm:$0xff] %vm1596, %v1446
      %1624 = vst.msk [vmem:[%s172 + $0xd8] sm:$0xff] %vm1596, %v1449
      %1625 = vst.msk [vmem:[%s172 + $0xe0] sm:$0xff] %vm1596, %v1454
      %1626 = vst.msk [vmem:[%s172 + $0xe8] sm:$0xff] %vm1596, %v1457
      %1627 = vst.msk [vmem:[%s172 + $0xf0] sm:$0xff] %vm1596, %v1462
      %1628 = vst.msk [vmem:[%s172 + $0xf8] sm:$0xff] %vm1596, %v1465
      %1629 = vst.msk [vmem:[%s172 + $0x100] sm:$0xff] %vm1596, %v1470
      %1630 = vst.msk [vmem:[%s172 + $0x108] sm:$0xff] %vm1596, %v1473
      %1631 = vst.msk [vmem:[%s172 + $0x110] sm:$0xff] %vm1596, %v1478
      %1632 = vst.msk [vmem:[%s172 + $0x118] sm:$0xff] %vm1596, %v1481
      %1633 = vst.msk [vmem:[%s172 + $0x120] sm:$0xff] %vm1596, %v1486
      %1634 = vst.msk [vmem:[%s172 + $0x128] sm:$0xff] %vm1596, %v1489
      %1635 = vst.msk [vmem:[%s172 + $0x130] sm:$0xff] %vm1596, %v1494
      %1636 = vst.msk [vmem:[%s172 + $0x138] sm:$0xff] %vm1596, %v1497
      %1637 = vst.msk [vmem:[%s172 + $0x140] sm:$0xff] %vm1596, %v1502
      %1638 = vst.msk [vmem:[%s172 + $0x148] sm:$0xff] %vm1596, %v1505
      %1639 = vst.msk [vmem:[%s172 + $0x150] sm:$0xff] %vm1596, %v1510
      %1640 = vst.msk [vmem:[%s172 + $0x158] sm:$0xff] %vm1596, %v1513
      %1641 = vst.msk [vmem:[%s172 + $0x160] sm:$0xff] %vm1596, %v1518
      %1642 = vst.msk [vmem:[%s172 + $0x168] sm:$0xff] %vm1596, %v1521
      %1643 = vst.msk [vmem:[%s172 + $0x170] sm:$0xff] %vm1596, %v1526
      %1644 = vst.msk [vmem:[%s172 + $0x178] sm:$0xff] %vm1596, %v1529
      %1645 = vst.msk [vmem:[%s172 + $0x180] sm:$0xff] %vm1596, %v1534
      %1646 = vst.msk [vmem:[%s172 + $0x188] sm:$0xff] %vm1596, %v1537
      %1647 = vst.msk [vmem:[%s172 + $0x190] sm:$0xff] %vm1596, %v1542
      %1648 = vst.msk [vmem:[%s172 + $0x198] sm:$0xff] %vm1596, %v1545
      %1649 = vst.msk [vmem:[%s172 + $0x1a0] sm:$0xff] %vm1596, %v1550
      %1650 = vst.msk [vmem:[%s172 + $0x1a8] sm:$0xff] %vm1596, %v1553
      %1651 = vst.msk [vmem:[%s172 + $0x1b0] sm:$0xff] %vm1596, %v1558
      %1652 = vst.msk [vmem:[%s172 + $0x1b8] sm:$0xff] %vm1596, %v1561
      %1653 = vst.msk [vmem:[%s172 + $0x1c0] sm:$0xff] %vm1596, %v1566
      %1654 = vst.msk [vmem:[%s172 + $0x1c8] sm:$0xff] %vm1596, %v1569
      %1655 = vst.msk [vmem:[%s172 + $0x1d0] sm:$0xff] %vm1596, %v1574
      %1656 = vst.msk [vmem:[%s172 + $0x1d8] sm:$0xff] %vm1596, %v1577
      %1657 = vst.msk [vmem:[%s172 + $0x1e0] sm:$0xff] %vm1596, %v1582
      %1658 = vst.msk [vmem:[%s172 + $0x1e8] sm:$0xff] %vm1596, %v1585
      %1659 = vst.msk [vmem:[%s172 + $0x1f0] sm:$0xff] %vm1596, %v1590
      %1660 = vst.msk [vmem:[%s172 + $0x1f8] sm:$0xff] %vm1596, %v1593
      %s1661 = smul.u32 64, %s14
      %p1662 = scmp.lt.s32.totalorder %s1661, 127
      %s1663 = scalar_select %p1662, %s1661, 127
      %s1664 = smul.addr %s1663, 8
      %s1665 = scalar_lea.vmem %s3, %s1664
      // Predicated region
      $region33: #{tpu_custom_call.1} parent=31 // pred_check
        %p1666 = pneg %p100
      $region34: #{tpu_custom_call.1} parent=31 // pred_check_branch
        %1668 = sbr.rel (%p1666) target = $region36
      $region35: #{tpu_custom_call.1} parent=31 // pred_region
        %s1669 = smul.u32 64, %s14
      $region36: #{tpu_custom_call.1} parent=31 // pred_fallthru
        _
    $region32: #{tpu_custom_call.1} parent=5 // pred_fallthru
      _
    %p1670 = scmp.le.s32.totalorder 2, %s9
    // Predicated region
    $region37: #{tpu_custom_call.1} parent=5 // pred_check
      %p1671 = pneg %p1670
    $region38: #{tpu_custom_call.1} parent=5 // pred_check_branch
      %1673 = sbr.rel (%p1671) target = $region40
    $region39: #{tpu_custom_call.1} parent=5 // pred_region
      %s1674 = ssub.s32 %s9, 2
      // Predicated region
      $region41: #{tpu_custom_call.1} parent=39 // pred_check
        %p1675 = pneg %p106
      $region42: #{tpu_custom_call.1} parent=39 // pred_check_branch
        %1677 = sbr.rel (%p1675) target = $region44
      $region43: #{tpu_custom_call.1} parent=39 // pred_region
        %s1678 = smul.u32 64, %s15
        %p1679 = scmp.lt.s32.totalorder %s1678, 127
        %s1680 = scalar_select %p1679, %s1678, 127
        %s1681 = smul.addr %s1680, 8
        %s1682 = scalar_lea.vmem %s3, %s1681
      $region44: #{tpu_custom_call.1} parent=39 // pred_fallthru
        _
    $region40: #{tpu_custom_call.1} parent=5 // pred_fallthru
      _
  $region6: #{tpu_custom_call.1} parent=0 // loop_footer
    %s13 = sadd.s32 1, %s9
  $region7: #{tpu_custom_call.1} parent=0 // loop_footer_branch
    %8 = sbr.rel target = $region3
  $region8: #{tpu_custom_call.1} parent=0 // loop_exit
    _

</llo_original>
